<compile_context>
chip_gen: v6e
topology: v6e:2x2x1
jax: 0.10.0
libtpu: 0.0.40
codegen_flags: <defaults>
</compile_context>

<pallas_src>
import jax
import jax.numpy as jnp
from jax import lax
from jax.experimental import pallas as pl
from jax.experimental.pallas import tpu as pltpu


def lstm_bidir_fc_kernel(emb_ref,    # (T*TB, E)   bf16, row = t*TB + j
                         wih_ref,    # (E, 8H)     bf16, [Wih_f^T | Wih_b^T]
                         whh_ref,    # (H, 8H)     bf16, [Whh_f^T | Whh_b^T]
                         b_ref,      # (1, 8H)     f32,  [b_f | b_b] (b_ih + b_hh)
                         fc_w_ref,   # (2H, Opad)  f32,  fc weight^T, zero-padded lanes
                         fc_b_ref,   # (1, Opad)   f32,  fc bias, zero-padded lanes
                         out_ref,    # (TB, Opad)  f32
                         xw_ref):    # scratch (T, 2*TB, 4H) f32
    TB = out_ref.shape[0]
    H = whh_ref.shape[0]
    T = emb_ref.shape[0] // TB
    H4 = 4 * H

    # --- One MXU pass: input projection for every timestep, both directions.
    xw = jnp.dot(emb_ref[...], wih_ref[...],
                 preferred_element_type=jnp.float32) + b_ref[...]      # (T*TB, 8H)

    # Re-pack into the per-step layout consumed by the fused recurrence
    # (outside the serial loop; static, unrolled copies):
    #   xw_ref[t, :TB]  = forward-direction gate inputs at time t
    #   xw_ref[t, TB:]  = backward-direction gate inputs at time T-1-t
    for t in range(T):
        fwd = xw[t * TB:(t + 1) * TB, :H4]
        bwd = xw[(T - 1 - t) * TB:(T - t) * TB, H4:]
        xw_ref[t] = jnp.concatenate([fwd, bwd], axis=0)                 # (2TB, 4H)

    whh = whh_ref[...]                                                  # (H, 8H)
    # Top TB rows carry the forward direction, bottom TB rows the backward one.
    is_fwd = lax.broadcasted_iota(jnp.int32, (2 * TB, H4), 0) < TB

    def body(t, carry):
        h, c = carry                                                    # (2TB, H)
        r = jnp.dot(h.astype(whh.dtype), whh,
                    preferred_element_type=jnp.float32)                 # (2TB, 8H)
        # Forward rows use the first 4H columns (Whh_f), backward rows the last 4H.
        gates = xw_ref[t] + jnp.where(is_fwd, r[:, :H4], r[:, H4:])     # (2TB, 4H)
        # Full-vreg activations, then lane slices (PyTorch gate order i, f, g, o).
        sg = jax.nn.sigmoid(gates)
        tg = jnp.tanh(gates)
        i_g = sg[:, 0 * H:1 * H]
        f_g = sg[:, 1 * H:2 * H]
        g_g = tg[:, 2 * H:3 * H]
        o_g = sg[:, 3 * H:4 * H]
        c_new = f_g * c + i_g * g_g
        h_new = o_g * jnp.tanh(c_new)
        return h_new, c_new

    h0 = jnp.zeros((2 * TB, H), jnp.float32)
    c0 = jnp.zeros((2 * TB, H), jnp.float32)
    h, _ = lax.fori_loop(0, T, body, (h0, c0), unroll=True)

    # torch.cat((hidden[-2], hidden[-1]), dim=1) == [forward final h, backward final h]
    hidden = jnp.concatenate([h[:TB], h[TB:]], axis=1)                  # (TB, 2H)
    out_ref[...] = (jnp.dot(hidden, fc_w_ref[...],
                            preferred_element_type=jnp.float32) + fc_b_ref[...])


def prepare_params(params, lane_pad=128):
    """One-time parameter prep: transpose, fuse biases, concat directions, cast, lane-pad fc."""
    (emb_table,
     wih_f, whh_f, bih_f, bhh_f,
     wih_b, whh_b, bih_b, bhh_b,
     fc_w, fc_b) = params
    H = whh_f.shape[1]
    O = fc_w.shape[0]
    O_pad = ((O + lane_pad - 1) // lane_pad) * lane_pad

    wih_cat = jnp.concatenate([wih_f.T, wih_b.T], axis=1).astype(jnp.bfloat16)   # (E, 8H)
    whh_cat = jnp.concatenate([whh_f.T, whh_b.T], axis=1).astype(jnp.bfloat16)   # (H, 8H)
    b_cat = jnp.concatenate([bih_f + bhh_f,
                             bih_b + bhh_b])[None, :].astype(jnp.float32)        # (1, 8H)

    fc_w_pad = jnp.zeros((2 * H, O_pad), jnp.float32).at[:, :O].set(
        fc_w.T.astype(jnp.float32))                                              # (2H, Opad)
    fc_b_pad = jnp.zeros((1, O_pad), jnp.float32).at[0, :O].set(
        fc_b.astype(jnp.float32))                                                # (1, Opad)

    return (emb_table.astype(jnp.bfloat16), wih_cat, whh_cat, b_cat, fc_w_pad, fc_b_pad)


def sentiment_classifier_forward(text, prepared, output_dim):
    """text: int32 (B, T). prepared: output of prepare_params. Returns float32 (B, output_dim)."""
    emb_table, wih_cat, whh_cat, b_cat, fc_w, fc_b = prepared
    B, T = text.shape
    E = emb_table.shape[1]
    H = whh_cat.shape[0]
    O_pad = fc_w.shape[1]

    TB = 8                                  # sublane-aligned batch tile
    nb = pl.cdiv(B, TB)
    B_pad = nb * TB

    # Embedding gather (plain-JAX glue).  Pad batch to a multiple of 8 sublanes,
    # pack into per-batch-block, time-major 2-D slabs: row index = t*TB + j.
    embedded = jnp.take(emb_table, text, axis=0)                        # (B, T, E) bf16
    if B_pad != B:
        embedded = jnp.pad(embedded, ((0, B_pad - B), (0, 0), (0, 0)))
    emb_blocks = (embedded.reshape(nb, TB, T, E)
                  .transpose(0, 2, 1, 3)
                  .reshape(nb, T * TB, E))                              # (nb, T*TB, E)

    out = pl.pallas_call(
        lstm_bidir_fc_kernel,
        out_shape=jax.ShapeDtypeStruct((B_pad, O_pad), jnp.float32),
        grid=(nb,),
        in_specs=[
            pl.BlockSpec((None, T * TB, E), lambda b: (b, 0, 0)),       # embedded slab
            pl.BlockSpec((E, 8 * H), lambda b: (0, 0)),                 # [Wih_f|Wih_b]^T
            pl.BlockSpec((H, 8 * H), lambda b: (0, 0)),                 # [Whh_f|Whh_b]^T
            pl.BlockSpec((1, 8 * H), lambda b: (0, 0)),                 # fused biases
            pl.BlockSpec((2 * H, O_pad), lambda b: (0, 0)),             # fc W^T (lane-padded)
            pl.BlockSpec((1, O_pad), lambda b: (0, 0)),                 # fc bias (lane-padded)
        ],
        out_specs=pl.BlockSpec((TB, O_pad), lambda b: (b, 0)),
        scratch_shapes=[pltpu.VMEM((T, 2 * TB, 4 * H), jnp.float32)],
        compiler_params=pltpu.CompilerParams(
            dimension_semantics=("parallel",)),
    )(emb_blocks, wih_cat, whh_cat, b_cat, fc_w, fc_b)
    return out[:B, :output_dim]


def init_params(key, input_dim, embedding_dim, hidden_dim, output_dim):
    """Deterministic synthetic init (shapes match nn.Embedding / nn.LSTM / nn.Linear)."""
    ks = jax.random.split(key, 11)
    H, E = hidden_dim, embedding_dim
    s = 1.0 / jnp.sqrt(H)

    emb_table = jax.random.normal(ks[0], (input_dim, E), jnp.float32)

    def u(k, shape):
        return jax.random.uniform(k, shape, jnp.float32, minval=-s, maxval=s)

    # forward direction LSTM params (PyTorch shapes)
    wih_f = u(ks[1], (4 * H, E))
    whh_f = u(ks[2], (4 * H, H))
    bih_f = u(ks[3], (4 * H,))
    bhh_f = u(ks[4], (4 * H,))
    # backward direction LSTM params
    wih_b = u(ks[5], (4 * H, E))
    whh_b = u(ks[6], (4 * H, H))
    bih_b = u(ks[7], (4 * H,))
    bhh_b = u(ks[8], (4 * H,))
    # final linear: (output_dim, 2H) + (output_dim,)
    fc_w = u(ks[9], (output_dim, 2 * H))
    fc_b = u(ks[10], (output_dim,))

    return (emb_table,
            wih_f, whh_f, bih_f, bhh_f,
            wih_b, whh_b, bih_b, bhh_b,
            fc_w, fc_b)


if __name__ == "__main__":
    # Small shapes consistent with the module: vocab=50, B=2, T=8, E=32, H=32, out=1
    INPUT_DIM, EMBED_DIM, HIDDEN_DIM, OUTPUT_DIM = 50, 32, 32, 1
    B, T = 2, 8

    key = jax.random.PRNGKey(0)
    k_text, k_params = jax.random.split(key)

    text = jax.random.randint(k_text, (B, T), 0, INPUT_DIM, dtype=jnp.int32)
    params = init_params(k_params, INPUT_DIM, EMBED_DIM, HIDDEN_DIM, OUTPUT_DIM)
    prepared = prepare_params(params)        # one-time param prep (hoisted out of forward)

    fwd = jax.jit(sentiment_classifier_forward, static_argnums=(2,))
    out = fwd(text, prepared, OUTPUT_DIM)
    jax.block_until_ready(out)
    assert out.shape == (B, OUTPUT_DIM)
    print("KERNEL_OK")
</pallas_src>

<mosaic_0001>
module attributes {stable_mosaic.version = 11 : i64} {
  func.func @lstm_bidir_fc_kernel(%arg0: i32, %arg1: memref<1x64x32xbf16, #tpu.memory_space<vmem>>, %arg2: memref<32x256xbf16, #tpu.memory_space<vmem>>, %arg3: memref<32x256xbf16, #tpu.memory_space<vmem>>, %arg4: memref<1x256xf32, #tpu.memory_space<vmem>>, %arg5: memref<64x128xf32, #tpu.memory_space<vmem>>, %arg6: memref<1x128xf32, #tpu.memory_space<vmem>>, %arg7: memref<8x128xf32, #tpu.memory_space<vmem>>, %arg8: memref<8x16x128xf32, #tpu.memory_space<vmem>>) attributes {dimension_semantics = [#tpu.dimension_semantics<parallel>], iteration_bounds = array<i64: 1>, scalar_prefetch = 0 : i64, scratch_operands = 1 : i64, tpu.core_type = #tpu.core_type<tc>, window_params = [{transform_indices = @transform_0, window_bounds = array<i64: 1, 64, 32>}, {pipeline_mode = #tpu.pipeline_mode<synchronous>, transform_indices = @transform_1, window_bounds = array<i64: 32, 256>}, {pipeline_mode = #tpu.pipeline_mode<synchronous>, transform_indices = @transform_2, window_bounds = array<i64: 32, 256>}, {pipeline_mode = #tpu.pipeline_mode<synchronous>, transform_indices = @transform_3, window_bounds = array<i64: 1, 256>}, {pipeline_mode = #tpu.pipeline_mode<synchronous>, transform_indices = @transform_4, window_bounds = array<i64: 64, 128>}, {pipeline_mode = #tpu.pipeline_mode<synchronous>, transform_indices = @transform_5, window_bounds = array<i64: 1, 128>}, {transform_indices = @transform_6, window_bounds = array<i64: 8, 128>}]} {
    %c0 = arith.constant 0 : index
    %c0_0 = arith.constant 0 : index
    %c0_1 = arith.constant 0 : index
    %0 = vector.load %arg1[%c0, %c0_0, %c0_1] : memref<1x64x32xbf16, #tpu.memory_space<vmem>>, vector<1x64x32xbf16>
    %1 = vector.shape_cast %0 : vector<1x64x32xbf16> to vector<64x32xbf16>
    %c0_2 = arith.constant 0 : index
    %c0_3 = arith.constant 0 : index
    %2 = vector.load %arg2[%c0_2, %c0_3] : memref<32x256xbf16, #tpu.memory_space<vmem>>, vector<32x256xbf16>
    %cst = arith.constant dense<0.000000e+00> : vector<64x256xf32>
    %3 = tpu.matmul %1, %2, %cst {dimension_numbers = #tpu.dot_dimension_numbers<[1], [0], [0], [1], [0, 0, 1, 1], [], []>} : vector<64x32xbf16>, vector<32x256xbf16>, vector<64x256xf32> -> vector<64x256xf32>
    %c0_4 = arith.constant 0 : index
    %c0_5 = arith.constant 0 : index
    %4 = vector.load %arg4[%c0_4, %c0_5] : memref<1x256xf32, #tpu.memory_space<vmem>>, vector<1x256xf32>
    %5 = vector.broadcast %4 : vector<1x256xf32> to vector<64x256xf32>
    %6 = arith.addf %3, %5 : vector<64x256xf32>
    %7 = vector.extract_strided_slice %6 {offsets = [0, 0], sizes = [8, 128], strides = [1, 1]} : vector<64x256xf32> to vector<8x128xf32>
    %8 = vector.extract_strided_slice %6 {offsets = [56, 128], sizes = [8, 128], strides = [1, 1]} : vector<64x256xf32> to vector<8x128xf32>
    %9 = tpu.concatenate %7, %8 in 0 : vector<8x128xf32>, vector<8x128xf32> -> vector<16x128xf32>
    %c0_6 = arith.constant 0 : index
    %c0_7 = arith.constant 0 : index
    %c0_8 = arith.constant 0 : index
    %10 = vector.load %arg8[%c0_6, %c0_7, %c0_8] : memref<8x16x128xf32, #tpu.memory_space<vmem>>, vector<1x16x128xf32>
    %11 = vector.shape_cast %10 : vector<1x16x128xf32> to vector<16x128xf32>
    %12 = vector.shape_cast %9 : vector<16x128xf32> to vector<1x16x128xf32>
    tpu.vector_store %arg8[%c0_6, %c0_7, %c0_8], %12 {strides = array<i32>} : memref<8x16x128xf32, #tpu.memory_space<vmem>>, vector<1x16x128xf32>,
    %13 = vector.extract_strided_slice %6 {offsets = [8, 0], sizes = [8, 128], strides = [1, 1]} : vector<64x256xf32> to vector<8x128xf32>
    %14 = vector.extract_strided_slice %6 {offsets = [48, 128], sizes = [8, 128], strides = [1, 1]} : vector<64x256xf32> to vector<8x128xf32>
    %15 = tpu.concatenate %13, %14 in 0 : vector<8x128xf32>, vector<8x128xf32> -> vector<16x128xf32>
    %c1 = arith.constant 1 : index
    %c0_9 = arith.constant 0 : index
    %c0_10 = arith.constant 0 : index
    %16 = vector.load %arg8[%c1, %c0_9, %c0_10] : memref<8x16x128xf32, #tpu.memory_space<vmem>>, vector<1x16x128xf32>
    %17 = vector.shape_cast %16 : vector<1x16x128xf32> to vector<16x128xf32>
    %18 = vector.shape_cast %15 : vector<16x128xf32> to vector<1x16x128xf32>
    tpu.vector_store %arg8[%c1, %c0_9, %c0_10], %18 {strides = array<i32>} : memref<8x16x128xf32, #tpu.memory_space<vmem>>, vector<1x16x128xf32>,
    %19 = vector.extract_strided_slice %6 {offsets = [16, 0], sizes = [8, 128], strides = [1, 1]} : vector<64x256xf32> to vector<8x128xf32>
    %20 = vector.extract_strided_slice %6 {offsets = [40, 128], sizes = [8, 128], strides = [1, 1]} : vector<64x256xf32> to vector<8x128xf32>
    %21 = tpu.concatenate %19, %20 in 0 : vector<8x128xf32>, vector<8x128xf32> -> vector<16x128xf32>
    %c2 = arith.constant 2 : index
    %c0_11 = arith.constant 0 : index
    %c0_12 = arith.constant 0 : index
    %22 = vector.load %arg8[%c2, %c0_11, %c0_12] : memref<8x16x128xf32, #tpu.memory_space<vmem>>, vector<1x16x128xf32>
    %23 = vector.shape_cast %22 : vector<1x16x128xf32> to vector<16x128xf32>
    %24 = vector.shape_cast %21 : vector<16x128xf32> to vector<1x16x128xf32>
    tpu.vector_store %arg8[%c2, %c0_11, %c0_12], %24 {strides = array<i32>} : memref<8x16x128xf32, #tpu.memory_space<vmem>>, vector<1x16x128xf32>,
    %25 = vector.extract_strided_slice %6 {offsets = [24, 0], sizes = [8, 128], strides = [1, 1]} : vector<64x256xf32> to vector<8x128xf32>
    %26 = vector.extract_strided_slice %6 {offsets = [32, 128], sizes = [8, 128], strides = [1, 1]} : vector<64x256xf32> to vector<8x128xf32>
    %27 = tpu.concatenate %25, %26 in 0 : vector<8x128xf32>, vector<8x128xf32> -> vector<16x128xf32>
    %c3 = arith.constant 3 : index
    %c0_13 = arith.constant 0 : index
    %c0_14 = arith.constant 0 : index
    %28 = vector.load %arg8[%c3, %c0_13, %c0_14] : memref<8x16x128xf32, #tpu.memory_space<vmem>>, vector<1x16x128xf32>
    %29 = vector.shape_cast %28 : vector<1x16x128xf32> to vector<16x128xf32>
    %30 = vector.shape_cast %27 : vector<16x128xf32> to vector<1x16x128xf32>
    tpu.vector_store %arg8[%c3, %c0_13, %c0_14], %30 {strides = array<i32>} : memref<8x16x128xf32, #tpu.memory_space<vmem>>, vector<1x16x128xf32>,
    %31 = vector.extract_strided_slice %6 {offsets = [32, 0], sizes = [8, 128], strides = [1, 1]} : vector<64x256xf32> to vector<8x128xf32>
    %32 = vector.extract_strided_slice %6 {offsets = [24, 128], sizes = [8, 128], strides = [1, 1]} : vector<64x256xf32> to vector<8x128xf32>
    %33 = tpu.concatenate %31, %32 in 0 : vector<8x128xf32>, vector<8x128xf32> -> vector<16x128xf32>
    %c4 = arith.constant 4 : index
    %c0_15 = arith.constant 0 : index
    %c0_16 = arith.constant 0 : index
    %34 = vector.load %arg8[%c4, %c0_15, %c0_16] : memref<8x16x128xf32, #tpu.memory_space<vmem>>, vector<1x16x128xf32>
    %35 = vector.shape_cast %34 : vector<1x16x128xf32> to vector<16x128xf32>
    %36 = vector.shape_cast %33 : vector<16x128xf32> to vector<1x16x128xf32>
    tpu.vector_store %arg8[%c4, %c0_15, %c0_16], %36 {strides = array<i32>} : memref<8x16x128xf32, #tpu.memory_space<vmem>>, vector<1x16x128xf32>,
    %37 = vector.extract_strided_slice %6 {offsets = [40, 0], sizes = [8, 128], strides = [1, 1]} : vector<64x256xf32> to vector<8x128xf32>
    %38 = vector.extract_strided_slice %6 {offsets = [16, 128], sizes = [8, 128], strides = [1, 1]} : vector<64x256xf32> to vector<8x128xf32>
    %39 = tpu.concatenate %37, %38 in 0 : vector<8x128xf32>, vector<8x128xf32> -> vector<16x128xf32>
    %c5 = arith.constant 5 : index
    %c0_17 = arith.constant 0 : index
    %c0_18 = arith.constant 0 : index
    %40 = vector.load %arg8[%c5, %c0_17, %c0_18] : memref<8x16x128xf32, #tpu.memory_space<vmem>>, vector<1x16x128xf32>
    %41 = vector.shape_cast %40 : vector<1x16x128xf32> to vector<16x128xf32>
    %42 = vector.shape_cast %39 : vector<16x128xf32> to vector<1x16x128xf32>
    tpu.vector_store %arg8[%c5, %c0_17, %c0_18], %42 {strides = array<i32>} : memref<8x16x128xf32, #tpu.memory_space<vmem>>, vector<1x16x128xf32>,
    %43 = vector.extract_strided_slice %6 {offsets = [48, 0], sizes = [8, 128], strides = [1, 1]} : vector<64x256xf32> to vector<8x128xf32>
    %44 = vector.extract_strided_slice %6 {offsets = [8, 128], sizes = [8, 128], strides = [1, 1]} : vector<64x256xf32> to vector<8x128xf32>
    %45 = tpu.concatenate %43, %44 in 0 : vector<8x128xf32>, vector<8x128xf32> -> vector<16x128xf32>
    %c6 = arith.constant 6 : index
    %c0_19 = arith.constant 0 : index
    %c0_20 = arith.constant 0 : index
    %46 = vector.load %arg8[%c6, %c0_19, %c0_20] : memref<8x16x128xf32, #tpu.memory_space<vmem>>, vector<1x16x128xf32>
    %47 = vector.shape_cast %46 : vector<1x16x128xf32> to vector<16x128xf32>
    %48 = vector.shape_cast %45 : vector<16x128xf32> to vector<1x16x128xf32>
    tpu.vector_store %arg8[%c6, %c0_19, %c0_20], %48 {strides = array<i32>} : memref<8x16x128xf32, #tpu.memory_space<vmem>>, vector<1x16x128xf32>,
    %49 = vector.extract_strided_slice %6 {offsets = [56, 0], sizes = [8, 128], strides = [1, 1]} : vector<64x256xf32> to vector<8x128xf32>
    %50 = vector.extract_strided_slice %6 {offsets = [0, 128], sizes = [8, 128], strides = [1, 1]} : vector<64x256xf32> to vector<8x128xf32>
    %51 = tpu.concatenate %49, %50 in 0 : vector<8x128xf32>, vector<8x128xf32> -> vector<16x128xf32>
    %c7 = arith.constant 7 : index
    %c0_21 = arith.constant 0 : index
    %c0_22 = arith.constant 0 : index
    %52 = vector.load %arg8[%c7, %c0_21, %c0_22] : memref<8x16x128xf32, #tpu.memory_space<vmem>>, vector<1x16x128xf32>
    %53 = vector.shape_cast %52 : vector<1x16x128xf32> to vector<16x128xf32>
    %54 = vector.shape_cast %51 : vector<16x128xf32> to vector<1x16x128xf32>
    tpu.vector_store %arg8[%c7, %c0_21, %c0_22], %54 {strides = array<i32>} : memref<8x16x128xf32, #tpu.memory_space<vmem>>, vector<1x16x128xf32>,
    %c0_23 = arith.constant 0 : index
    %c0_24 = arith.constant 0 : index
    %55 = vector.load %arg3[%c0_23, %c0_24] : memref<32x256xbf16, #tpu.memory_space<vmem>>, vector<32x256xbf16>
    %56 = tpu.iota {dimensions = array<i32: 0>} : vector<16x128xi32>
    %c8_i32 = arith.constant 8 : i32
    %57 = vector.broadcast %c8_i32 : i32 to vector<16x128xi32>
    %58 = arith.cmpi slt, %56, %57 : vector<16x128xi32>
    %cst_25 = arith.constant 0.000000e+00 : f32
    %59 = vector.broadcast %cst_25 : f32 to vector<16x32xf32>
    %cst_26 = arith.constant 0.000000e+00 : f32
    %60 = vector.broadcast %cst_26 : f32 to vector<16x32xf32>
    %c0_i32 = arith.constant 0 : i32
    %61 = arith.truncf %59 : vector<16x32xf32> to vector<16x32xbf16>
    %cst_27 = arith.constant dense<0.000000e+00> : vector<16x256xf32>
    %62 = tpu.matmul %61, %55, %cst_27 {dimension_numbers = #tpu.dot_dimension_numbers<[1], [0], [0], [1], [0, 0, 1, 1], [], []>} : vector<16x32xbf16>, vector<32x256xbf16>, vector<16x256xf32> -> vector<16x256xf32>
    %63 = arith.index_cast %c0_i32 : i32 to index
    %c0_28 = arith.constant 0 : index
    %c0_29 = arith.constant 0 : index
    %64 = vector.load %arg8[%63, %c0_28, %c0_29] : memref<8x16x128xf32, #tpu.memory_space<vmem>>, vector<1x16x128xf32>
    %65 = vector.shape_cast %64 : vector<1x16x128xf32> to vector<16x128xf32>
    %66 = vector.extract_strided_slice %62 {offsets = [0, 0], sizes = [16, 128], strides = [1, 1]} : vector<16x256xf32> to vector<16x128xf32>
    %67 = vector.extract_strided_slice %62 {offsets = [0, 128], sizes = [16, 128], strides = [1, 1]} : vector<16x256xf32> to vector<16x128xf32>
    %68 = arith.select %58, %66, %67 : vector<16x128xi1>, vector<16x128xf32>
    %69 = arith.addf %65, %68 : vector<16x128xf32>
    %70 = arith.negf %69 : vector<16x128xf32>
    %71 = math.exp %70 : vector<16x128xf32>
    %cst_30 = arith.constant 1.000000e+00 : f32
    %72 = vector.broadcast %cst_30 : f32 to vector<16x128xf32>
    %73 = arith.addf %72, %71 : vector<16x128xf32>
    %74 = arith.divf %72, %73 : vector<16x128xf32>
    %75 = math.tanh %69 : vector<16x128xf32>
    %76 = vector.extract_strided_slice %74 {offsets = [0, 0], sizes = [16, 32], strides = [1, 1]} : vector<16x128xf32> to vector<16x32xf32>
    %77 = vector.extract_strided_slice %74 {offsets = [0, 32], sizes = [16, 32], strides = [1, 1]} : vector<16x128xf32> to vector<16x32xf32>
    %78 = vector.extract_strided_slice %75 {offsets = [0, 64], sizes = [16, 32], strides = [1, 1]} : vector<16x128xf32> to vector<16x32xf32>
    %79 = vector.extract_strided_slice %74 {offsets = [0, 96], sizes = [16, 32], strides = [1, 1]} : vector<16x128xf32> to vector<16x32xf32>
    %80 = arith.mulf %77, %60 : vector<16x32xf32>
    %81 = arith.mulf %76, %78 : vector<16x32xf32>
    %82 = arith.addf %80, %81 : vector<16x32xf32>
    %83 = math.tanh %82 : vector<16x32xf32>
    %84 = arith.mulf %79, %83 : vector<16x32xf32>
    %c1_i32 = arith.constant 1 : i32
    %85 = arith.truncf %84 : vector<16x32xf32> to vector<16x32xbf16>
    %cst_31 = arith.constant dense<0.000000e+00> : vector<16x256xf32>
    %86 = tpu.matmul %85, %55, %cst_31 {dimension_numbers = #tpu.dot_dimension_numbers<[1], [0], [0], [1], [0, 0, 1, 1], [], []>} : vector<16x32xbf16>, vector<32x256xbf16>, vector<16x256xf32> -> vector<16x256xf32>
    %87 = arith.index_cast %c1_i32 : i32 to index
    %c0_32 = arith.constant 0 : index
    %c0_33 = arith.constant 0 : index
    %88 = vector.load %arg8[%87, %c0_32, %c0_33] : memref<8x16x128xf32, #tpu.memory_space<vmem>>, vector<1x16x128xf32>
    %89 = vector.shape_cast %88 : vector<1x16x128xf32> to vector<16x128xf32>
    %90 = vector.extract_strided_slice %86 {offsets = [0, 0], sizes = [16, 128], strides = [1, 1]} : vector<16x256xf32> to vector<16x128xf32>
    %91 = vector.extract_strided_slice %86 {offsets = [0, 128], sizes = [16, 128], strides = [1, 1]} : vector<16x256xf32> to vector<16x128xf32>
    %92 = arith.select %58, %90, %91 : vector<16x128xi1>, vector<16x128xf32>
    %93 = arith.addf %89, %92 : vector<16x128xf32>
    %94 = arith.negf %93 : vector<16x128xf32>
    %95 = math.exp %94 : vector<16x128xf32>
    %cst_34 = arith.constant 1.000000e+00 : f32
    %96 = vector.broadcast %cst_34 : f32 to vector<16x128xf32>
    %97 = arith.addf %96, %95 : vector<16x128xf32>
    %98 = arith.divf %96, %97 : vector<16x128xf32>
    %99 = math.tanh %93 : vector<16x128xf32>
    %100 = vector.extract_strided_slice %98 {offsets = [0, 0], sizes = [16, 32], strides = [1, 1]} : vector<16x128xf32> to vector<16x32xf32>
    %101 = vector.extract_strided_slice %98 {offsets = [0, 32], sizes = [16, 32], strides = [1, 1]} : vector<16x128xf32> to vector<16x32xf32>
    %102 = vector.extract_strided_slice %99 {offsets = [0, 64], sizes = [16, 32], strides = [1, 1]} : vector<16x128xf32> to vector<16x32xf32>
    %103 = vector.extract_strided_slice %98 {offsets = [0, 96], sizes = [16, 32], strides = [1, 1]} : vector<16x128xf32> to vector<16x32xf32>
    %104 = arith.mulf %101, %82 : vector<16x32xf32>
    %105 = arith.mulf %100, %102 : vector<16x32xf32>
    %106 = arith.addf %104, %105 : vector<16x32xf32>
    %107 = math.tanh %106 : vector<16x32xf32>
    %108 = arith.mulf %103, %107 : vector<16x32xf32>
    %c2_i32 = arith.constant 2 : i32
    %109 = arith.truncf %108 : vector<16x32xf32> to vector<16x32xbf16>
    %cst_35 = arith.constant dense<0.000000e+00> : vector<16x256xf32>
    %110 = tpu.matmul %109, %55, %cst_35 {dimension_numbers = #tpu.dot_dimension_numbers<[1], [0], [0], [1], [0, 0, 1, 1], [], []>} : vector<16x32xbf16>, vector<32x256xbf16>, vector<16x256xf32> -> vector<16x256xf32>
    %111 = arith.index_cast %c2_i32 : i32 to index
    %c0_36 = arith.constant 0 : index
    %c0_37 = arith.constant 0 : index
    %112 = vector.load %arg8[%111, %c0_36, %c0_37] : memref<8x16x128xf32, #tpu.memory_space<vmem>>, vector<1x16x128xf32>
    %113 = vector.shape_cast %112 : vector<1x16x128xf32> to vector<16x128xf32>
    %114 = vector.extract_strided_slice %110 {offsets = [0, 0], sizes = [16, 128], strides = [1, 1]} : vector<16x256xf32> to vector<16x128xf32>
    %115 = vector.extract_strided_slice %110 {offsets = [0, 128], sizes = [16, 128], strides = [1, 1]} : vector<16x256xf32> to vector<16x128xf32>
    %116 = arith.select %58, %114, %115 : vector<16x128xi1>, vector<16x128xf32>
    %117 = arith.addf %113, %116 : vector<16x128xf32>
    %118 = arith.negf %117 : vector<16x128xf32>
    %119 = math.exp %118 : vector<16x128xf32>
    %cst_38 = arith.constant 1.000000e+00 : f32
    %120 = vector.broadcast %cst_38 : f32 to vector<16x128xf32>
    %121 = arith.addf %120, %119 : vector<16x128xf32>
    %122 = arith.divf %120, %121 : vector<16x128xf32>
    %123 = math.tanh %117 : vector<16x128xf32>
    %124 = vector.extract_strided_slice %122 {offsets = [0, 0], sizes = [16, 32], strides = [1, 1]} : vector<16x128xf32> to vector<16x32xf32>
    %125 = vector.extract_strided_slice %122 {offsets = [0, 32], sizes = [16, 32], strides = [1, 1]} : vector<16x128xf32> to vector<16x32xf32>
    %126 = vector.extract_strided_slice %123 {offsets = [0, 64], sizes = [16, 32], strides = [1, 1]} : vector<16x128xf32> to vector<16x32xf32>
    %127 = vector.extract_strided_slice %122 {offsets = [0, 96], sizes = [16, 32], strides = [1, 1]} : vector<16x128xf32> to vector<16x32xf32>
    %128 = arith.mulf %125, %106 : vector<16x32xf32>
    %129 = arith.mulf %124, %126 : vector<16x32xf32>
    %130 = arith.addf %128, %129 : vector<16x32xf32>
    %131 = math.tanh %130 : vector<16x32xf32>
    %132 = arith.mulf %127, %131 : vector<16x32xf32>
    %c3_i32 = arith.constant 3 : i32
    %133 = arith.truncf %132 : vector<16x32xf32> to vector<16x32xbf16>
    %cst_39 = arith.constant dense<0.000000e+00> : vector<16x256xf32>
    %134 = tpu.matmul %133, %55, %cst_39 {dimension_numbers = #tpu.dot_dimension_numbers<[1], [0], [0], [1], [0, 0, 1, 1], [], []>} : vector<16x32xbf16>, vector<32x256xbf16>, vector<16x256xf32> -> vector<16x256xf32>
    %135 = arith.index_cast %c3_i32 : i32 to index
    %c0_40 = arith.constant 0 : index
    %c0_41 = arith.constant 0 : index
    %136 = vector.load %arg8[%135, %c0_40, %c0_41] : memref<8x16x128xf32, #tpu.memory_space<vmem>>, vector<1x16x128xf32>
    %137 = vector.shape_cast %136 : vector<1x16x128xf32> to vector<16x128xf32>
    %138 = vector.extract_strided_slice %134 {offsets = [0, 0], sizes = [16, 128], strides = [1, 1]} : vector<16x256xf32> to vector<16x128xf32>
    %139 = vector.extract_strided_slice %134 {offsets = [0, 128], sizes = [16, 128], strides = [1, 1]} : vector<16x256xf32> to vector<16x128xf32>
    %140 = arith.select %58, %138, %139 : vector<16x128xi1>, vector<16x128xf32>
    %141 = arith.addf %137, %140 : vector<16x128xf32>
    %142 = arith.negf %141 : vector<16x128xf32>
    %143 = math.exp %142 : vector<16x128xf32>
    %cst_42 = arith.constant 1.000000e+00 : f32
    %144 = vector.broadcast %cst_42 : f32 to vector<16x128xf32>
    %145 = arith.addf %144, %143 : vector<16x128xf32>
    %146 = arith.divf %144, %145 : vector<16x128xf32>
    %147 = math.tanh %141 : vector<16x128xf32>
    %148 = vector.extract_strided_slice %146 {offsets = [0, 0], sizes = [16, 32], strides = [1, 1]} : vector<16x128xf32> to vector<16x32xf32>
    %149 = vector.extract_strided_slice %146 {offsets = [0, 32], sizes = [16, 32], strides = [1, 1]} : vector<16x128xf32> to vector<16x32xf32>
    %150 = vector.extract_strided_slice %147 {offsets = [0, 64], sizes = [16, 32], strides = [1, 1]} : vector<16x128xf32> to vector<16x32xf32>
    %151 = vector.extract_strided_slice %146 {offsets = [0, 96], sizes = [16, 32], strides = [1, 1]} : vector<16x128xf32> to vector<16x32xf32>
    %152 = arith.mulf %149, %130 : vector<16x32xf32>
    %153 = arith.mulf %148, %150 : vector<16x32xf32>
    %154 = arith.addf %152, %153 : vector<16x32xf32>
    %155 = math.tanh %154 : vector<16x32xf32>
    %156 = arith.mulf %151, %155 : vector<16x32xf32>
    %c4_i32 = arith.constant 4 : i32
    %157 = arith.truncf %156 : vector<16x32xf32> to vector<16x32xbf16>
    %cst_43 = arith.constant dense<0.000000e+00> : vector<16x256xf32>
    %158 = tpu.matmul %157, %55, %cst_43 {dimension_numbers = #tpu.dot_dimension_numbers<[1], [0], [0], [1], [0, 0, 1, 1], [], []>} : vector<16x32xbf16>, vector<32x256xbf16>, vector<16x256xf32> -> vector<16x256xf32>
    %159 = arith.index_cast %c4_i32 : i32 to index
    %c0_44 = arith.constant 0 : index
    %c0_45 = arith.constant 0 : index
    %160 = vector.load %arg8[%159, %c0_44, %c0_45] : memref<8x16x128xf32, #tpu.memory_space<vmem>>, vector<1x16x128xf32>
    %161 = vector.shape_cast %160 : vector<1x16x128xf32> to vector<16x128xf32>
    %162 = vector.extract_strided_slice %158 {offsets = [0, 0], sizes = [16, 128], strides = [1, 1]} : vector<16x256xf32> to vector<16x128xf32>
    %163 = vector.extract_strided_slice %158 {offsets = [0, 128], sizes = [16, 128], strides = [1, 1]} : vector<16x256xf32> to vector<16x128xf32>
    %164 = arith.select %58, %162, %163 : vector<16x128xi1>, vector<16x128xf32>
    %165 = arith.addf %161, %164 : vector<16x128xf32>
    %166 = arith.negf %165 : vector<16x128xf32>
    %167 = math.exp %166 : vector<16x128xf32>
    %cst_46 = arith.constant 1.000000e+00 : f32
    %168 = vector.broadcast %cst_46 : f32 to vector<16x128xf32>
    %169 = arith.addf %168, %167 : vector<16x128xf32>
    %170 = arith.divf %168, %169 : vector<16x128xf32>
    %171 = math.tanh %165 : vector<16x128xf32>
    %172 = vector.extract_strided_slice %170 {offsets = [0, 0], sizes = [16, 32], strides = [1, 1]} : vector<16x128xf32> to vector<16x32xf32>
    %173 = vector.extract_strided_slice %170 {offsets = [0, 32], sizes = [16, 32], strides = [1, 1]} : vector<16x128xf32> to vector<16x32xf32>
    %174 = vector.extract_strided_slice %171 {offsets = [0, 64], sizes = [16, 32], strides = [1, 1]} : vector<16x128xf32> to vector<16x32xf32>
    %175 = vector.extract_strided_slice %170 {offsets = [0, 96], sizes = [16, 32], strides = [1, 1]} : vector<16x128xf32> to vector<16x32xf32>
    %176 = arith.mulf %173, %154 : vector<16x32xf32>
    %177 = arith.mulf %172, %174 : vector<16x32xf32>
    %178 = arith.addf %176, %177 : vector<16x32xf32>
    %179 = math.tanh %178 : vector<16x32xf32>
    %180 = arith.mulf %175, %179 : vector<16x32xf32>
    %c5_i32 = arith.constant 5 : i32
    %181 = arith.truncf %180 : vector<16x32xf32> to vector<16x32xbf16>
    %cst_47 = arith.constant dense<0.000000e+00> : vector<16x256xf32>
    %182 = tpu.matmul %181, %55, %cst_47 {dimension_numbers = #tpu.dot_dimension_numbers<[1], [0], [0], [1], [0, 0, 1, 1], [], []>} : vector<16x32xbf16>, vector<32x256xbf16>, vector<16x256xf32> -> vector<16x256xf32>
    %183 = arith.index_cast %c5_i32 : i32 to index
    %c0_48 = arith.constant 0 : index
    %c0_49 = arith.constant 0 : index
    %184 = vector.load %arg8[%183, %c0_48, %c0_49] : memref<8x16x128xf32, #tpu.memory_space<vmem>>, vector<1x16x128xf32>
    %185 = vector.shape_cast %184 : vector<1x16x128xf32> to vector<16x128xf32>
    %186 = vector.extract_strided_slice %182 {offsets = [0, 0], sizes = [16, 128], strides = [1, 1]} : vector<16x256xf32> to vector<16x128xf32>
    %187 = vector.extract_strided_slice %182 {offsets = [0, 128], sizes = [16, 128], strides = [1, 1]} : vector<16x256xf32> to vector<16x128xf32>
    %188 = arith.select %58, %186, %187 : vector<16x128xi1>, vector<16x128xf32>
    %189 = arith.addf %185, %188 : vector<16x128xf32>
    %190 = arith.negf %189 : vector<16x128xf32>
    %191 = math.exp %190 : vector<16x128xf32>
    %cst_50 = arith.constant 1.000000e+00 : f32
    %192 = vector.broadcast %cst_50 : f32 to vector<16x128xf32>
    %193 = arith.addf %192, %191 : vector<16x128xf32>
    %194 = arith.divf %192, %193 : vector<16x128xf32>
    %195 = math.tanh %189 : vector<16x128xf32>
    %196 = vector.extract_strided_slice %194 {offsets = [0, 0], sizes = [16, 32], strides = [1, 1]} : vector<16x128xf32> to vector<16x32xf32>
    %197 = vector.extract_strided_slice %194 {offsets = [0, 32], sizes = [16, 32], strides = [1, 1]} : vector<16x128xf32> to vector<16x32xf32>
    %198 = vector.extract_strided_slice %195 {offsets = [0, 64], sizes = [16, 32], strides = [1, 1]} : vector<16x128xf32> to vector<16x32xf32>
    %199 = vector.extract_strided_slice %194 {offsets = [0, 96], sizes = [16, 32], strides = [1, 1]} : vector<16x128xf32> to vector<16x32xf32>
    %200 = arith.mulf %197, %178 : vector<16x32xf32>
    %201 = arith.mulf %196, %198 : vector<16x32xf32>
    %202 = arith.addf %200, %201 : vector<16x32xf32>
    %203 = math.tanh %202 : vector<16x32xf32>
    %204 = arith.mulf %199, %203 : vector<16x32xf32>
    %c6_i32 = arith.constant 6 : i32
    %205 = arith.truncf %204 : vector<16x32xf32> to vector<16x32xbf16>
    %cst_51 = arith.constant dense<0.000000e+00> : vector<16x256xf32>
    %206 = tpu.matmul %205, %55, %cst_51 {dimension_numbers = #tpu.dot_dimension_numbers<[1], [0], [0], [1], [0, 0, 1, 1], [], []>} : vector<16x32xbf16>, vector<32x256xbf16>, vector<16x256xf32> -> vector<16x256xf32>
    %207 = arith.index_cast %c6_i32 : i32 to index
    %c0_52 = arith.constant 0 : index
    %c0_53 = arith.constant 0 : index
    %208 = vector.load %arg8[%207, %c0_52, %c0_53] : memref<8x16x128xf32, #tpu.memory_space<vmem>>, vector<1x16x128xf32>
    %209 = vector.shape_cast %208 : vector<1x16x128xf32> to vector<16x128xf32>
    %210 = vector.extract_strided_slice %206 {offsets = [0, 0], sizes = [16, 128], strides = [1, 1]} : vector<16x256xf32> to vector<16x128xf32>
    %211 = vector.extract_strided_slice %206 {offsets = [0, 128], sizes = [16, 128], strides = [1, 1]} : vector<16x256xf32> to vector<16x128xf32>
    %212 = arith.select %58, %210, %211 : vector<16x128xi1>, vector<16x128xf32>
    %213 = arith.addf %209, %212 : vector<16x128xf32>
    %214 = arith.negf %213 : vector<16x128xf32>
    %215 = math.exp %214 : vector<16x128xf32>
    %cst_54 = arith.constant 1.000000e+00 : f32
    %216 = vector.broadcast %cst_54 : f32 to vector<16x128xf32>
    %217 = arith.addf %216, %215 : vector<16x128xf32>
    %218 = arith.divf %216, %217 : vector<16x128xf32>
    %219 = math.tanh %213 : vector<16x128xf32>
    %220 = vector.extract_strided_slice %218 {offsets = [0, 0], sizes = [16, 32], strides = [1, 1]} : vector<16x128xf32> to vector<16x32xf32>
    %221 = vector.extract_strided_slice %218 {offsets = [0, 32], sizes = [16, 32], strides = [1, 1]} : vector<16x128xf32> to vector<16x32xf32>
    %222 = vector.extract_strided_slice %219 {offsets = [0, 64], sizes = [16, 32], strides = [1, 1]} : vector<16x128xf32> to vector<16x32xf32>
    %223 = vector.extract_strided_slice %218 {offsets = [0, 96], sizes = [16, 32], strides = [1, 1]} : vector<16x128xf32> to vector<16x32xf32>
    %224 = arith.mulf %221, %202 : vector<16x32xf32>
    %225 = arith.mulf %220, %222 : vector<16x32xf32>
    %226 = arith.addf %224, %225 : vector<16x32xf32>
    %227 = math.tanh %226 : vector<16x32xf32>
    %228 = arith.mulf %223, %227 : vector<16x32xf32>
    %c7_i32 = arith.constant 7 : i32
    %229 = arith.truncf %228 : vector<16x32xf32> to vector<16x32xbf16>
    %cst_55 = arith.constant dense<0.000000e+00> : vector<16x256xf32>
    %230 = tpu.matmul %229, %55, %cst_55 {dimension_numbers = #tpu.dot_dimension_numbers<[1], [0], [0], [1], [0, 0, 1, 1], [], []>} : vector<16x32xbf16>, vector<32x256xbf16>, vector<16x256xf32> -> vector<16x256xf32>
    %231 = arith.index_cast %c7_i32 : i32 to index
    %c0_56 = arith.constant 0 : index
    %c0_57 = arith.constant 0 : index
    %232 = vector.load %arg8[%231, %c0_56, %c0_57] : memref<8x16x128xf32, #tpu.memory_space<vmem>>, vector<1x16x128xf32>
    %233 = vector.shape_cast %232 : vector<1x16x128xf32> to vector<16x128xf32>
    %234 = vector.extract_strided_slice %230 {offsets = [0, 0], sizes = [16, 128], strides = [1, 1]} : vector<16x256xf32> to vector<16x128xf32>
    %235 = vector.extract_strided_slice %230 {offsets = [0, 128], sizes = [16, 128], strides = [1, 1]} : vector<16x256xf32> to vector<16x128xf32>
    %236 = arith.select %58, %234, %235 : vector<16x128xi1>, vector<16x128xf32>
    %237 = arith.addf %233, %236 : vector<16x128xf32>
    %238 = arith.negf %237 : vector<16x128xf32>
    %239 = math.exp %238 : vector<16x128xf32>
    %cst_58 = arith.constant 1.000000e+00 : f32
    %240 = vector.broadcast %cst_58 : f32 to vector<16x128xf32>
    %241 = arith.addf %240, %239 : vector<16x128xf32>
    %242 = arith.divf %240, %241 : vector<16x128xf32>
    %243 = math.tanh %237 : vector<16x128xf32>
    %244 = vector.extract_strided_slice %242 {offsets = [0, 0], sizes = [16, 32], strides = [1, 1]} : vector<16x128xf32> to vector<16x32xf32>
    %245 = vector.extract_strided_slice %242 {offsets = [0, 32], sizes = [16, 32], strides = [1, 1]} : vector<16x128xf32> to vector<16x32xf32>
    %246 = vector.extract_strided_slice %243 {offsets = [0, 64], sizes = [16, 32], strides = [1, 1]} : vector<16x128xf32> to vector<16x32xf32>
    %247 = vector.extract_strided_slice %242 {offsets = [0, 96], sizes = [16, 32], strides = [1, 1]} : vector<16x128xf32> to vector<16x32xf32>
    %248 = arith.mulf %245, %226 : vector<16x32xf32>
    %249 = arith.mulf %244, %246 : vector<16x32xf32>
    %250 = arith.addf %248, %249 : vector<16x32xf32>
    %251 = math.tanh %250 : vector<16x32xf32>
    %252 = arith.mulf %247, %251 : vector<16x32xf32>
    %c8_i32_59 = arith.constant 8 : i32
    %253 = vector.extract_strided_slice %252 {offsets = [0, 0], sizes = [8, 32], strides = [1, 1]} : vector<16x32xf32> to vector<8x32xf32>
    %254 = vector.extract_strided_slice %252 {offsets = [8, 0], sizes = [8, 32], strides = [1, 1]} : vector<16x32xf32> to vector<8x32xf32>
    %255 = tpu.concatenate %253, %254 in 1 : vector<8x32xf32>, vector<8x32xf32> -> vector<8x64xf32>
    %c0_60 = arith.constant 0 : index
    %c0_61 = arith.constant 0 : index
    %256 = vector.load %arg5[%c0_60, %c0_61] : memref<64x128xf32, #tpu.memory_space<vmem>>, vector<64x128xf32>
    %cst_62 = arith.constant dense<0.000000e+00> : vector<8x128xf32>
    %257 = tpu.matmul %255, %256, %cst_62 {dimension_numbers = #tpu.dot_dimension_numbers<[1], [0], [0], [1], [0, 0, 1, 1], [], []>} : vector<8x64xf32>, vector<64x128xf32>, vector<8x128xf32> -> vector<8x128xf32>
    %c0_63 = arith.constant 0 : index
    %c0_64 = arith.constant 0 : index
    %258 = vector.load %arg6[%c0_63, %c0_64] : memref<1x128xf32, #tpu.memory_space<vmem>>, vector<1x128xf32>
    %259 = vector.broadcast %258 : vector<1x128xf32> to vector<8x128xf32>
    %260 = arith.addf %257, %259 : vector<8x128xf32>
    %c0_65 = arith.constant 0 : index
    %c0_66 = arith.constant 0 : index
    %261 = vector.load %arg7[%c0_65, %c0_66] : memref<8x128xf32, #tpu.memory_space<vmem>>, vector<8x128xf32>
    tpu.vector_store %arg7[%c0_65, %c0_66], %260 {strides = array<i32>} : memref<8x128xf32, #tpu.memory_space<vmem>>, vector<8x128xf32>,
    return
  }
  func.func @transform_0(%arg0: i32) -> (i32, i32, i32) {
    %c0_i32 = arith.constant 0 : i32
    %c0_i32_0 = arith.constant 0 : i32
    %c0_i32_1 = arith.constant 0 : i32
    return %arg0, %c0_i32, %c0_i32_0 : i32, i32, i32
  }
  func.func @transform_1(%arg0: i32) -> (i32, i32) {
    %c0_i32 = arith.constant 0 : i32
    %c0_i32_0 = arith.constant 0 : i32
    %c0_i32_1 = arith.constant 0 : i32
    return %c0_i32, %c0_i32_0 : i32, i32
  }
  func.func @transform_2(%arg0: i32) -> (i32, i32) {
    %c0_i32 = arith.constant 0 : i32
    %c0_i32_0 = arith.constant 0 : i32
    %c0_i32_1 = arith.constant 0 : i32
    return %c0_i32, %c0_i32_0 : i32, i32
  }
  func.func @transform_3(%arg0: i32) -> (i32, i32) {
    %c0_i32 = arith.constant 0 : i32
    %c0_i32_0 = arith.constant 0 : i32
    %c0_i32_1 = arith.constant 0 : i32
    return %c0_i32, %c0_i32_0 : i32, i32
  }
  func.func @transform_4(%arg0: i32) -> (i32, i32) {
    %c0_i32 = arith.constant 0 : i32
    %c0_i32_0 = arith.constant 0 : i32
    %c0_i32_1 = arith.constant 0 : i32
    return %c0_i32, %c0_i32_0 : i32, i32
  }
  func.func @transform_5(%arg0: i32) -> (i32, i32) {
    %c0_i32 = arith.constant 0 : i32
    %c0_i32_0 = arith.constant 0 : i32
    %c0_i32_1 = arith.constant 0 : i32
    return %c0_i32, %c0_i32_0 : i32, i32
  }
  func.func @transform_6(%arg0: i32) -> (i32, i32) {
    %c0_i32 = arith.constant 0 : i32
    %c0_i32_0 = arith.constant 0 : i32
    return %arg0, %c0_i32 : i32, i32
  }
}

</mosaic_0001>

<llo_original>
// kernel: sentiment_classifier_forward.1
$region0: #{sentiment_classifier_forward.1}
  #allocation0 [shape = 'u32[]', space=smem, size = 0x4, offset = 0x4, fixed_abs, tag = 'smem constant byte address 0x4 - core index']
  #allocation1 [shape = 'u32[144,128]{1,0:T(1,128)}', space=vmem, size = 0x12000, scoped, tag = 'internal scratch']
  #allocation2 [shape = 'f32[8,16,128]{2,1,0:T(8,128)}', space=vmem, size = 0x10000, scoped, tag = 'scratch operand']
  %s0 = inlined_call_operand.vmem [shape: bf16[1,64,32], index: 0, kind: input, shape index: {}]
  %s1 = inlined_call_operand.vmem [shape: bf16[32,256], index: 1, kind: input, shape index: {}]
  %s2 = inlined_call_operand.vmem [shape: bf16[32,256], index: 2, kind: input, shape index: {}]
  %s3 = inlined_call_operand.vmem [shape: f32[1,256], index: 3, kind: input, shape index: {}]
  %s4 = inlined_call_operand.vmem [shape: f32[64,128], index: 4, kind: input, shape index: {}]
  %s5 = inlined_call_operand.vmem [shape: f32[1,128], index: 5, kind: input, shape index: {}]
  %s6 = inlined_call_operand.vmem [shape: f32[8,128], index: 6, kind: output, shape index: {}]
  %s7 = sld [smem:[#allocation0]]
  $region34: #{sentiment_classifier_forward.1} parent=0
    _
  %s9 = ssub.s32 1, %s7
  %s10 = scalar_select 0, %s9, %s7
  // Predicated region
  $region2: #{sentiment_classifier_forward.1} parent=0 // pred_check
    _
  $region3: #{sentiment_classifier_forward.1} parent=0 // pred_check_branch
    %12 = sbr.rel (0) target = $region5
  $region4: #{sentiment_classifier_forward.1} parent=0 // pred_region
    _
  $region5: #{sentiment_classifier_forward.1} parent=0 // pred_fallthru
    _
  // Predicated region
  $region6: #{sentiment_classifier_forward.1} parent=0 // pred_check
    _
  $region7: #{sentiment_classifier_forward.1} parent=0 // pred_check_branch
    %14 = sbr.rel (0) target = $region9
  $region8: #{sentiment_classifier_forward.1} parent=0 // pred_region
    _
  $region9: #{sentiment_classifier_forward.1} parent=0 // pred_fallthru
    _
  // Predicated region
  $region10: #{sentiment_classifier_forward.1} parent=0 // pred_check
    _
  $region11: #{sentiment_classifier_forward.1} parent=0 // pred_check_branch
    %16 = sbr.rel (0) target = $region13
  $region12: #{sentiment_classifier_forward.1} parent=0 // pred_region
    _
  $region13: #{sentiment_classifier_forward.1} parent=0 // pred_fallthru
    _
  // Predicated region
  $region14: #{sentiment_classifier_forward.1} parent=0 // pred_check
    _
  $region15: #{sentiment_classifier_forward.1} parent=0 // pred_check_branch
    %18 = sbr.rel (0) target = $region17
  $region16: #{sentiment_classifier_forward.1} parent=0 // pred_region
    _
  $region17: #{sentiment_classifier_forward.1} parent=0 // pred_fallthru
    _
  // Predicated region
  $region18: #{sentiment_classifier_forward.1} parent=0 // pred_check
    _
  $region19: #{sentiment_classifier_forward.1} parent=0 // pred_check_branch
    %20 = sbr.rel (0) target = $region21
  $region20: #{sentiment_classifier_forward.1} parent=0 // pred_region
    _
  $region21: #{sentiment_classifier_forward.1} parent=0 // pred_fallthru
    _
  // Predicated region
  $region22: #{sentiment_classifier_forward.1} parent=0 // pred_check
    _
  $region23: #{sentiment_classifier_forward.1} parent=0 // pred_check_branch
    %22 = sbr.rel (0) target = $region25
  $region24: #{sentiment_classifier_forward.1} parent=0 // pred_region
    _
  $region25: #{sentiment_classifier_forward.1} parent=0 // pred_fallthru
    _
  %v24 = vld [vmem:[%s0] sm:$0xf]
  %v25 = vld [vmem:[%s0 + $0x4] sm:$0xf]
  %v26 = vld [vmem:[%s0 + $0x8] sm:$0xf]
  %v27 = vld [vmem:[%s0 + $0xc] sm:$0xf]
  %v28 = vld [vmem:[%s0 + $0x10] sm:$0xf]
  %v29 = vld [vmem:[%s0 + $0x14] sm:$0xf]
  %v30 = vld [vmem:[%s0 + $0x18] sm:$0xf]
  %v31 = vld [vmem:[%s0 + $0x1c] sm:$0xf]
  %v32 = vld [vmem:[%s1] sm:$0xff]
  %v33 = vld [vmem:[%s1 + $0x8] sm:$0xff]
  %v34 = vld [vmem:[%s1 + $0x10] sm:$0xff]
  %v35 = vld [vmem:[%s1 + $0x18] sm:$0xff]
  %v36 = vld [vmem:[%s3] sm:$0x3]
  %v38 = vlaneseq
  %v39 = vshrl.u32 %v38, 7
  %v40 = vsub.s32 0, %v39
  %v41 = vrot.slane %v36, %v40
  %v42 = vlaneseq
  %v43 = vshrl.u32 %v42, 7
  %v44 = vsub.s32 1, %v43
  %v45 = vrot.slane %v36, %v44
  %v56 = vunpack.c.l.b16 %v24
  %v57 = vunpack.c.l.b16 %v25
  %v58 = vunpack.c.l.b16 %v26
  %v59 = vunpack.c.l.b16 %v27
  %v60 = vunpack.c.l.b16 %v28
  %v61 = vunpack.c.l.b16 %v29
  %v62 = vunpack.c.l.b16 %v30
  %v63 = vunpack.c.l.b16 %v31
  %v64 = vpack.c.b16 %v57, %v56
  %v65 = vpack.c.b16 %v59, %v58
  %v66 = vpack.c.b16 %v61, %v60
  %v67 = vpack.c.b16 %v63, %v62
  %v72 = vunpack.c.l.b16 %v32
  %v73 = vunpack.c.h.b16 %v32
  %v74 = vunpack.c.l.b16 %v33
  %v75 = vunpack.c.h.b16 %v33
  %v76 = vunpack.c.l.b16 %v34
  %v77 = vunpack.c.h.b16 %v34
  %v78 = vunpack.c.l.b16 %v35
  %v79 = vunpack.c.h.b16 %v35
  %v80 = vpack.c.b16 %v74, %v72
  %v81 = vpack.c.b16 %v75, %v73
  %v82 = vpack.c.b16 %v78, %v76
  %v83 = vpack.c.b16 %v79, %v77
  %vm88 = vcmask 261120
  %v90 = vsel %vm88, %v64, 0
  %v93 = vsel %vm88, %v65, 0
  %v96 = vsel %vm88, %v66, 0
  %v99 = vsel %vm88, %v67, 0
  %101 = vmatprep.subr.bf16.mxu0 0
  %102 = vmatpush1.bf16.msra.mxu0 0
  %103 = vmatprep.subr.bf16.mxu0 0
  %104 = vmatpush1.bf16.msra.mxu0 0
  %105 = vmatprep.subr.bf16.mxu0 0
  %106 = vmatpush1.bf16.msra.mxu0 0
  %107 = vmatprep.subr.bf16.mxu0 0
  %108 = vmatpush1.bf16.msra.mxu0 0
  %109 = vmatprep.subr.bf16.mxu0 0
  %110 = vmatpush1.bf16.msra.mxu0 0
  %111 = vmatprep.subr.bf16.mxu0 0
  %112 = vmatpush1.bf16.msra.mxu0 0
  %113 = vmatprep.subr.bf16.mxu0 %v83
  %114 = vmatpush1.bf16.msra.mxu0 %v82
  %115 = vmatprep.subr.bf16.mxu0 %v81
  %116 = vmatpush1.bf16.msra.mxu0 %v80
  %117 = vmatprep.subr.bf16.mxu0 0
  %118 = vmatpush2.bf16.msra.mxu0 0
  %119 = vmatprep.subr.bf16.mxu0 0
  %120 = vmatpush2.bf16.msra.mxu0 0
  %121 = vmatprep.subr.bf16.mxu0 0
  %122 = vmatpush2.bf16.msra.mxu0 0
  %123 = vmatprep.subr.bf16.mxu0 0
  %124 = vmatpush2.bf16.msra.mxu0 0
  %125 = vmatprep.subr.bf16.mxu0 0
  %126 = vmatpush2.bf16.msra.mxu0 0
  %127 = vmatprep.subr.bf16.mxu0 0
  %128 = vmatpush2.bf16.msra.mxu0 0
  %129 = vmatprep.subr.bf16.mxu0 0
  %130 = vmatpush2.bf16.msra.mxu0 0
  %131 = vmatprep.subr.bf16.mxu0 0
  %132 = vmatpush2.bf16.msra.mxu0 0
  %133 = vmatprep.mubr.bf16.mxu0 0
  %134 = vmatmul.mubr.bf16.gmra.mxu0 %v90
  %v135 = vpop.f32.mrf.mxu0
  %v136 = vadd.f32 %v41, %v135
  %v137 = vpop.f32.mrf.mxu0
  %v138 = vadd.f32 %v45, %v137
  %v139 = vpop.f32.mrf.mxu0
  %v140 = vadd.f32 %v41, %v139
  %v141 = vpop.f32.mrf.mxu0
  %v142 = vadd.f32 %v45, %v141
  %143 = vmatprep.mubr.bf16.mxu0 0
  %144 = vmatmul.mubr.bf16.gmra.mxu0 %v93
  %v145 = vpop.f32.mrf.mxu0
  %v146 = vadd.f32 %v41, %v145
  %v147 = vpop.f32.mrf.mxu0
  %v148 = vadd.f32 %v45, %v147
  %v149 = vpop.f32.mrf.mxu0
  %v150 = vadd.f32 %v41, %v149
  %v151 = vpop.f32.mrf.mxu0
  %v152 = vadd.f32 %v45, %v151
  %153 = vmatprep.mubr.bf16.mxu0 0
  %154 = vmatmul.mubr.bf16.gmra.mxu0 %v96
  %v155 = vpop.f32.mrf.mxu0
  %v156 = vadd.f32 %v41, %v155
  %v157 = vpop.f32.mrf.mxu0
  %v158 = vadd.f32 %v45, %v157
  %v159 = vpop.f32.mrf.mxu0
  %v160 = vadd.f32 %v41, %v159
  %v161 = vpop.f32.mrf.mxu0
  %v162 = vadd.f32 %v45, %v161
  %163 = vmatprep.mubr.bf16.mxu0 0
  %164 = vmatmul.mubr.bf16.gmra.mxu0 %v99
  %v165 = vpop.f32.mrf.mxu0
  %v166 = vadd.f32 %v41, %v165
  %v167 = vpop.f32.mrf.mxu0
  %v168 = vadd.f32 %v45, %v167
  %v169 = vpop.f32.mrf.mxu0
  %v170 = vadd.f32 %v41, %v169
  %v171 = vpop.f32.mrf.mxu0
  %v172 = vadd.f32 %v45, %v171
  %173 = vdwg.mxu0
  %174 = vst [vmem:[#allocation2] sm:$0xff] %v136
  %175 = vst [vmem:[#allocation2 + $0x8] sm:$0xff] %v172
  %s176 = scalar_lea.vmem [#allocation2], 16
  %177 = vst [vmem:[%s176] sm:$0xff] %v140
  %178 = vst [vmem:[%s176 + $0x8] sm:$0xff] %v168
  %s179 = scalar_lea.vmem [#allocation2], 32
  %180 = vst [vmem:[%s179] sm:$0xff] %v146
  %181 = vst [vmem:[%s179 + $0x8] sm:$0xff] %v162
  %s182 = scalar_lea.vmem [#allocation2], 48
  %183 = vst [vmem:[%s182] sm:$0xff] %v150
  %184 = vst [vmem:[%s182 + $0x8] sm:$0xff] %v158
  %s185 = scalar_lea.vmem [#allocation2], 64
  %186 = vst [vmem:[%s185] sm:$0xff] %v156
  %187 = vst [vmem:[%s185 + $0x8] sm:$0xff] %v152
  %s188 = scalar_lea.vmem [#allocation2], 80
  %189 = vst [vmem:[%s188] sm:$0xff] %v160
  %190 = vst [vmem:[%s188 + $0x8] sm:$0xff] %v148
  %s191 = scalar_lea.vmem [#allocation2], 96
  %192 = vst [vmem:[%s191] sm:$0xff] %v166
  %193 = vst [vmem:[%s191 + $0x8] sm:$0xff] %v142
  %s194 = scalar_lea.vmem [#allocation2], 112
  %195 = vst [vmem:[%s194] sm:$0xff] %v170
  %196 = vst [vmem:[%s194 + $0x8] sm:$0xff] %v138
  %v197 = vld [vmem:[%s2] sm:$0xff]
  %v198 = vld [vmem:[%s2 + $0x8] sm:$0xff]
  %v199 = vld [vmem:[%s2 + $0x10] sm:$0xff]
  %v200 = vld [vmem:[%s2 + $0x18] sm:$0xff]
  %v201 = vlaneseq
  %v202 = vshrl.u32 %v201, 7
  %v203 = vadd.s32 %v202, 8
  %vm204 = vcmp.lt.s32.totalorder %v202, 8
  %vm205 = vcmp.lt.s32.totalorder %v203, 8
  %v210 = vunpack.c.l.b16 %v197
  %v211 = vunpack.c.h.b16 %v197
  %v212 = vunpack.c.l.b16 %v198
  %v213 = vunpack.c.h.b16 %v198
  %v214 = vunpack.c.l.b16 %v199
  %v215 = vunpack.c.h.b16 %v199
  %v216 = vunpack.c.l.b16 %v200
  %v217 = vunpack.c.h.b16 %v200
  %v218 = vpack.c.b16 %v212, %v210
  %v219 = vpack.c.b16 %v213, %v211
  %v220 = vpack.c.b16 %v216, %v214
  %v221 = vpack.c.b16 %v217, %v215
  %v227 = vsel %vm88, 0, 0
  %229 = vmatprep.subr.bf16.mxu0 0
  %230 = vmatpush1.bf16.msra.mxu0 0
  %231 = vmatprep.subr.bf16.mxu0 0
  %232 = vmatpush1.bf16.msra.mxu0 0
  %233 = vmatprep.subr.bf16.mxu0 0
  %234 = vmatpush1.bf16.msra.mxu0 0
  %235 = vmatprep.subr.bf16.mxu0 0
  %236 = vmatpush1.bf16.msra.mxu0 0
  %237 = vmatprep.subr.bf16.mxu0 0
  %238 = vmatpush1.bf16.msra.mxu0 0
  %239 = vmatprep.subr.bf16.mxu0 0
  %240 = vmatpush1.bf16.msra.mxu0 0
  %241 = vmatprep.subr.bf16.mxu0 %v221
  %242 = vmatpush1.bf16.msra.mxu0 %v220
  %243 = vmatprep.subr.bf16.mxu0 %v219
  %244 = vmatpush1.bf16.msra.mxu0 %v218
  %245 = vmatprep.subr.bf16.mxu0 0
  %246 = vmatpush2.bf16.msra.mxu0 0
  %247 = vmatprep.subr.bf16.mxu0 0
  %248 = vmatpush2.bf16.msra.mxu0 0
  %249 = vmatprep.subr.bf16.mxu0 0
  %250 = vmatpush2.bf16.msra.mxu0 0
  %251 = vmatprep.subr.bf16.mxu0 0
  %252 = vmatpush2.bf16.msra.mxu0 0
  %253 = vmatprep.subr.bf16.mxu0 0
  %254 = vmatpush2.bf16.msra.mxu0 0
  %255 = vmatprep.subr.bf16.mxu0 0
  %256 = vmatpush2.bf16.msra.mxu0 0
  %257 = vmatprep.subr.bf16.mxu0 0
  %258 = vmatpush2.bf16.msra.mxu0 0
  %259 = vmatprep.subr.bf16.mxu0 0
  %260 = vmatpush2.bf16.msra.mxu0 0
  %261 = vmatprep.mubr.bf16.mxu0 0
  %262 = vmatmul.mubr.bf16.gmra.mxu0 %v227
  %v263 = vpop.f32.mrf.mxu0
  %v264 = vadd.f32 0.0, %v263
  %v265 = vpop.f32.mrf.mxu0
  %v266 = vadd.f32 0.0, %v265
  %v267 = vpop.f32.mrf.mxu0
  %v268 = vadd.f32 0.0, %v267
  %v269 = vpop.f32.mrf.mxu0
  %v270 = vadd.f32 0.0, %v269
  %271 = vdwg.mxu0
  %v272 = vld [vmem:[#allocation2] sm:$0xff]
  %v273 = vld [vmem:[#allocation2 + $0x8] sm:$0xff]
  %v274 = vsel %vm204, %v264, %v266
  %v275 = vsel %vm205, %v268, %v270
  %v276 = vadd.f32 %v272, %v274
  %v277 = vadd.f32 %v273, %v275
  %v278 = vxor.u32 %v276, 2147483648
  %v279 = vxor.u32 %v277, 2147483648
  %v280 = vmul.f32 %v278, 1.442695
  %v281 = vpow.pop %v280
  %v282 = vmul.f32 %v279, 1.442695
  %v283 = vpow.pop %v282
  %v284 = vadd.f32 %v281, 1.0
  %v285 = vadd.f32 %v283, 1.0
  %v286 = vrcp.pop %v284
  %v287 = vmul.f32 1.0, %v286
  %v288 = vrcp.pop %v285
  %v289 = vmul.f32 1.0, %v288
  %v290 = vtanh.pop %v276
  %v291 = vtanh.pop %v277
  %v292 = vmul.f32 %v287, 0.0
  %v293 = vmul.f32 %v289, 0.0
  %296 = vrot.lane.b32.xlu0 %v290, 64
  %v297 = vpop.permute.xlu0 %296
  %298 = vrot.lane.b32.xlu0 %v291, 64
  %v299 = vpop.permute.xlu0 %298
  %v302 = vmul.f32 %v287, %v297
  %v303 = vmul.f32 %v289, %v299
  %306 = vrot.lane.b32.xlu0 %v302, 32
  %v307 = vpop.permute.xlu0 %306
  %308 = vrot.lane.b32.xlu0 %v303, 32
  %v309 = vpop.permute.xlu0 %308
  %v312 = vadd.f32 %v292, %v307
  %v313 = vadd.f32 %v293, %v309
  %v314 = vtanh.pop %v312
  %v315 = vtanh.pop %v313
  %318 = vrot.lane.b32.xlu0 %v314, 64
  %v319 = vpop.permute.xlu0 %318
  %320 = vrot.lane.b32.xlu0 %v315, 64
  %v321 = vpop.permute.xlu0 %320
  %v324 = vmul.f32 %v287, %v319
  %v325 = vmul.f32 %v289, %v321
  %v326 = vpack.c.bf16 %v325, %v324
  %328 = vrot.lane.b32.xlu0 %v326, 32
  %v329 = vpop.permute.xlu0 %328
  %v331 = vsel %vm88, %v329, 0
  %333 = vmatprep.subr.bf16.mxu0 0
  %334 = vmatpush1.bf16.msra.mxu0 0
  %335 = vmatprep.subr.bf16.mxu0 0
  %336 = vmatpush1.bf16.msra.mxu0 0
  %337 = vmatprep.subr.bf16.mxu0 0
  %338 = vmatpush1.bf16.msra.mxu0 0
  %339 = vmatprep.subr.bf16.mxu0 0
  %340 = vmatpush1.bf16.msra.mxu0 0
  %341 = vmatprep.subr.bf16.mxu0 0
  %342 = vmatpush1.bf16.msra.mxu0 0
  %343 = vmatprep.subr.bf16.mxu0 0
  %344 = vmatpush1.bf16.msra.mxu0 0
  %345 = vmatprep.subr.bf16.mxu0 %v221
  %346 = vmatpush1.bf16.msra.mxu0 %v220
  %347 = vmatprep.subr.bf16.mxu0 %v219
  %348 = vmatpush1.bf16.msra.mxu0 %v218
  %349 = vmatprep.subr.bf16.mxu0 0
  %350 = vmatpush2.bf16.msra.mxu0 0
  %351 = vmatprep.subr.bf16.mxu0 0
  %352 = vmatpush2.bf16.msra.mxu0 0
  %353 = vmatprep.subr.bf16.mxu0 0
  %354 = vmatpush2.bf16.msra.mxu0 0
  %355 = vmatprep.subr.bf16.mxu0 0
  %356 = vmatpush2.bf16.msra.mxu0 0
  %357 = vmatprep.subr.bf16.mxu0 0
  %358 = vmatpush2.bf16.msra.mxu0 0
  %359 = vmatprep.subr.bf16.mxu0 0
  %360 = vmatpush2.bf16.msra.mxu0 0
  %361 = vmatprep.subr.bf16.mxu0 0
  %362 = vmatpush2.bf16.msra.mxu0 0
  %363 = vmatprep.subr.bf16.mxu0 0
  %364 = vmatpush2.bf16.msra.mxu0 0
  %365 = vmatprep.mubr.bf16.mxu0 0
  %366 = vmatmul.mubr.bf16.gmra.mxu0 %v331
  %v367 = vpop.f32.mrf.mxu0
  %v368 = vadd.f32 0.0, %v367
  %v369 = vpop.f32.mrf.mxu0
  %v370 = vadd.f32 0.0, %v369
  %v371 = vpop.f32.mrf.mxu0
  %v372 = vadd.f32 0.0, %v371
  %v373 = vpop.f32.mrf.mxu0
  %v374 = vadd.f32 0.0, %v373
  %375 = vdwg.mxu0
  %v376 = vld [vmem:[%s176] sm:$0xff]
  %v377 = vld [vmem:[%s176 + $0x8] sm:$0xff]
  %v378 = vsel %vm204, %v368, %v370
  %v379 = vsel %vm205, %v372, %v374
  %v380 = vadd.f32 %v376, %v378
  %v381 = vadd.f32 %v377, %v379
  %v382 = vxor.u32 %v380, 2147483648
  %v383 = vxor.u32 %v381, 2147483648
  %v384 = vmul.f32 %v382, 1.442695
  %v385 = vpow.pop %v384
  %v386 = vmul.f32 %v383, 1.442695
  %v387 = vpow.pop %v386
  %v388 = vadd.f32 %v385, 1.0
  %v389 = vadd.f32 %v387, 1.0
  %v390 = vrcp.pop %v388
  %v391 = vmul.f32 1.0, %v390
  %v392 = vrcp.pop %v389
  %v393 = vmul.f32 1.0, %v392
  %v394 = vtanh.pop %v380
  %v395 = vtanh.pop %v381
  %v396 = vmul.f32 %v391, %v312
  %v397 = vmul.f32 %v393, %v313
  %400 = vrot.lane.b32.xlu0 %v394, 64
  %v401 = vpop.permute.xlu0 %400
  %402 = vrot.lane.b32.xlu0 %v395, 64
  %v403 = vpop.permute.xlu0 %402
  %v406 = vmul.f32 %v391, %v401
  %v407 = vmul.f32 %v393, %v403
  %410 = vrot.lane.b32.xlu0 %v406, 32
  %v411 = vpop.permute.xlu0 %410
  %412 = vrot.lane.b32.xlu0 %v407, 32
  %v413 = vpop.permute.xlu0 %412
  %v416 = vadd.f32 %v396, %v411
  %v417 = vadd.f32 %v397, %v413
  %v418 = vtanh.pop %v416
  %v419 = vtanh.pop %v417
  %422 = vrot.lane.b32.xlu0 %v418, 64
  %v423 = vpop.permute.xlu0 %422
  %424 = vrot.lane.b32.xlu0 %v419, 64
  %v425 = vpop.permute.xlu0 %424
  %v428 = vmul.f32 %v391, %v423
  %v429 = vmul.f32 %v393, %v425
  %v430 = vpack.c.bf16 %v429, %v428
  %432 = vrot.lane.b32.xlu0 %v430, 32
  %v433 = vpop.permute.xlu0 %432
  %v435 = vsel %vm88, %v433, 0
  %437 = vmatprep.subr.bf16.mxu0 0
  %438 = vmatpush1.bf16.msra.mxu0 0
  %439 = vmatprep.subr.bf16.mxu0 0
  %440 = vmatpush1.bf16.msra.mxu0 0
  %441 = vmatprep.subr.bf16.mxu0 0
  %442 = vmatpush1.bf16.msra.mxu0 0
  %443 = vmatprep.subr.bf16.mxu0 0
  %444 = vmatpush1.bf16.msra.mxu0 0
  %445 = vmatprep.subr.bf16.mxu0 0
  %446 = vmatpush1.bf16.msra.mxu0 0
  %447 = vmatprep.subr.bf16.mxu0 0
  %448 = vmatpush1.bf16.msra.mxu0 0
  %449 = vmatprep.subr.bf16.mxu0 %v221
  %450 = vmatpush1.bf16.msra.mxu0 %v220
  %451 = vmatprep.subr.bf16.mxu0 %v219
  %452 = vmatpush1.bf16.msra.mxu0 %v218
  %453 = vmatprep.subr.bf16.mxu0 0
  %454 = vmatpush2.bf16.msra.mxu0 0
  %455 = vmatprep.subr.bf16.mxu0 0
  %456 = vmatpush2.bf16.msra.mxu0 0
  %457 = vmatprep.subr.bf16.mxu0 0
  %458 = vmatpush2.bf16.msra.mxu0 0
  %459 = vmatprep.subr.bf16.mxu0 0
  %460 = vmatpush2.bf16.msra.mxu0 0
  %461 = vmatprep.subr.bf16.mxu0 0
  %462 = vmatpush2.bf16.msra.mxu0 0
  %463 = vmatprep.subr.bf16.mxu0 0
  %464 = vmatpush2.bf16.msra.mxu0 0
  %465 = vmatprep.subr.bf16.mxu0 0
  %466 = vmatpush2.bf16.msra.mxu0 0
  %467 = vmatprep.subr.bf16.mxu0 0
  %468 = vmatpush2.bf16.msra.mxu0 0
  %469 = vmatprep.mubr.bf16.mxu0 0
  %470 = vmatmul.mubr.bf16.gmra.mxu0 %v435
  %v471 = vpop.f32.mrf.mxu0
  %v472 = vadd.f32 0.0, %v471
  %v473 = vpop.f32.mrf.mxu0
  %v474 = vadd.f32 0.0, %v473
  %v475 = vpop.f32.mrf.mxu0
  %v476 = vadd.f32 0.0, %v475
  %v477 = vpop.f32.mrf.mxu0
  %v478 = vadd.f32 0.0, %v477
  %479 = vdwg.mxu0
  %v480 = vld [vmem:[%s179] sm:$0xff]
  %v481 = vld [vmem:[%s179 + $0x8] sm:$0xff]
  %v482 = vsel %vm204, %v472, %v474
  %v483 = vsel %vm205, %v476, %v478
  %v484 = vadd.f32 %v480, %v482
  %v485 = vadd.f32 %v481, %v483
  %v486 = vxor.u32 %v484, 2147483648
  %v487 = vxor.u32 %v485, 2147483648
  %v488 = vmul.f32 %v486, 1.442695
  %v489 = vpow.pop %v488
  %v490 = vmul.f32 %v487, 1.442695
  %v491 = vpow.pop %v490
  %v492 = vadd.f32 %v489, 1.0
  %v493 = vadd.f32 %v491, 1.0
  %v494 = vrcp.pop %v492
  %v495 = vmul.f32 1.0, %v494
  %v496 = vrcp.pop %v493
  %v497 = vmul.f32 1.0, %v496
  %v498 = vtanh.pop %v484
  %v499 = vtanh.pop %v485
  %v500 = vmul.f32 %v495, %v416
  %v501 = vmul.f32 %v497, %v417
  %504 = vrot.lane.b32.xlu0 %v498, 64
  %v505 = vpop.permute.xlu0 %504
  %506 = vrot.lane.b32.xlu0 %v499, 64
  %v507 = vpop.permute.xlu0 %506
  %v510 = vmul.f32 %v495, %v505
  %v511 = vmul.f32 %v497, %v507
  %514 = vrot.lane.b32.xlu0 %v510, 32
  %v515 = vpop.permute.xlu0 %514
  %516 = vrot.lane.b32.xlu0 %v511, 32
  %v517 = vpop.permute.xlu0 %516
  %v520 = vadd.f32 %v500, %v515
  %v521 = vadd.f32 %v501, %v517
  %v522 = vtanh.pop %v520
  %v523 = vtanh.pop %v521
  %526 = vrot.lane.b32.xlu0 %v522, 64
  %v527 = vpop.permute.xlu0 %526
  %528 = vrot.lane.b32.xlu0 %v523, 64
  %v529 = vpop.permute.xlu0 %528
  %v532 = vmul.f32 %v495, %v527
  %v533 = vmul.f32 %v497, %v529
  %v534 = vpack.c.bf16 %v533, %v532
  %536 = vrot.lane.b32.xlu0 %v534, 32
  %v537 = vpop.permute.xlu0 %536
  %v539 = vsel %vm88, %v537, 0
  %541 = vmatprep.subr.bf16.mxu0 0
  %542 = vmatpush1.bf16.msra.mxu0 0
  %543 = vmatprep.subr.bf16.mxu0 0
  %544 = vmatpush1.bf16.msra.mxu0 0
  %545 = vmatprep.subr.bf16.mxu0 0
  %546 = vmatpush1.bf16.msra.mxu0 0
  %547 = vmatprep.subr.bf16.mxu0 0
  %548 = vmatpush1.bf16.msra.mxu0 0
  %549 = vmatprep.subr.bf16.mxu0 0
  %550 = vmatpush1.bf16.msra.mxu0 0
  %551 = vmatprep.subr.bf16.mxu0 0
  %552 = vmatpush1.bf16.msra.mxu0 0
  %553 = vmatprep.subr.bf16.mxu0 %v221
  %554 = vmatpush1.bf16.msra.mxu0 %v220
  %555 = vmatprep.subr.bf16.mxu0 %v219
  %556 = vmatpush1.bf16.msra.mxu0 %v218
  %557 = vmatprep.subr.bf16.mxu0 0
  %558 = vmatpush2.bf16.msra.mxu0 0
  %559 = vmatprep.subr.bf16.mxu0 0
  %560 = vmatpush2.bf16.msra.mxu0 0
  %561 = vmatprep.subr.bf16.mxu0 0
  %562 = vmatpush2.bf16.msra.mxu0 0
  %563 = vmatprep.subr.bf16.mxu0 0
  %564 = vmatpush2.bf16.msra.mxu0 0
  %565 = vmatprep.subr.bf16.mxu0 0
  %566 = vmatpush2.bf16.msra.mxu0 0
  %567 = vmatprep.subr.bf16.mxu0 0
  %568 = vmatpush2.bf16.msra.mxu0 0
  %569 = vmatprep.subr.bf16.mxu0 0
  %570 = vmatpush2.bf16.msra.mxu0 0
  %571 = vmatprep.subr.bf16.mxu0 0
  %572 = vmatpush2.bf16.msra.mxu0 0
  %573 = vmatprep.mubr.bf16.mxu0 0
  %574 = vmatmul.mubr.bf16.gmra.mxu0 %v539
  %v575 = vpop.f32.mrf.mxu0
  %v576 = vadd.f32 0.0, %v575
  %v577 = vpop.f32.mrf.mxu0
  %v578 = vadd.f32 0.0, %v577
  %v579 = vpop.f32.mrf.mxu0
  %v580 = vadd.f32 0.0, %v579
  %v581 = vpop.f32.mrf.mxu0
  %v582 = vadd.f32 0.0, %v581
  %583 = vdwg.mxu0
  %v584 = vld [vmem:[%s182] sm:$0xff]
  %v585 = vld [vmem:[%s182 + $0x8] sm:$0xff]
  %v586 = vsel %vm204, %v576, %v578
  %v587 = vsel %vm205, %v580, %v582
  %v588 = vadd.f32 %v584, %v586
  %v589 = vadd.f32 %v585, %v587
  %v590 = vxor.u32 %v588, 2147483648
  %v591 = vxor.u32 %v589, 2147483648
  %v592 = vmul.f32 %v590, 1.442695
  %v593 = vpow.pop %v592
  %v594 = vmul.f32 %v591, 1.442695
  %v595 = vpow.pop %v594
  %v596 = vadd.f32 %v593, 1.0
  %v597 = vadd.f32 %v595, 1.0
  %v598 = vrcp.pop %v596
  %v599 = vmul.f32 1.0, %v598
  %v600 = vrcp.pop %v597
  %v601 = vmul.f32 1.0, %v600
  %v602 = vtanh.pop %v588
  %v603 = vtanh.pop %v589
  %v604 = vmul.f32 %v599, %v520
  %v605 = vmul.f32 %v601, %v521
  %608 = vrot.lane.b32.xlu0 %v602, 64
  %v609 = vpop.permute.xlu0 %608
  %610 = vrot.lane.b32.xlu0 %v603, 64
  %v611 = vpop.permute.xlu0 %610
  %v614 = vmul.f32 %v599, %v609
  %v615 = vmul.f32 %v601, %v611
  %618 = vrot.lane.b32.xlu0 %v614, 32
  %v619 = vpop.permute.xlu0 %618
  %620 = vrot.lane.b32.xlu0 %v615, 32
  %v621 = vpop.permute.xlu0 %620
  %v624 = vadd.f32 %v604, %v619
  %v625 = vadd.f32 %v605, %v621
  %v626 = vtanh.pop %v624
  %v627 = vtanh.pop %v625
  %630 = vrot.lane.b32.xlu0 %v626, 64
  %v631 = vpop.permute.xlu0 %630
  %632 = vrot.lane.b32.xlu0 %v627, 64
  %v633 = vpop.permute.xlu0 %632
  %v636 = vmul.f32 %v599, %v631
  %v637 = vmul.f32 %v601, %v633
  %v638 = vpack.c.bf16 %v637, %v636
  %640 = vrot.lane.b32.xlu0 %v638, 32
  %v641 = vpop.permute.xlu0 %640
  %v643 = vsel %vm88, %v641, 0
  %645 = vmatprep.subr.bf16.mxu0 0
  %646 = vmatpush1.bf16.msra.mxu0 0
  %647 = vmatprep.subr.bf16.mxu0 0
  %648 = vmatpush1.bf16.msra.mxu0 0
  %649 = vmatprep.subr.bf16.mxu0 0
  %650 = vmatpush1.bf16.msra.mxu0 0
  %651 = vmatprep.subr.bf16.mxu0 0
  %652 = vmatpush1.bf16.msra.mxu0 0
  %653 = vmatprep.subr.bf16.mxu0 0
  %654 = vmatpush1.bf16.msra.mxu0 0
  %655 = vmatprep.subr.bf16.mxu0 0
  %656 = vmatpush1.bf16.msra.mxu0 0
  %657 = vmatprep.subr.bf16.mxu0 %v221
  %658 = vmatpush1.bf16.msra.mxu0 %v220
  %659 = vmatprep.subr.bf16.mxu0 %v219
  %660 = vmatpush1.bf16.msra.mxu0 %v218
  %661 = vmatprep.subr.bf16.mxu0 0
  %662 = vmatpush2.bf16.msra.mxu0 0
  %663 = vmatprep.subr.bf16.mxu0 0
  %664 = vmatpush2.bf16.msra.mxu0 0
  %665 = vmatprep.subr.bf16.mxu0 0
  %666 = vmatpush2.bf16.msra.mxu0 0
  %667 = vmatprep.subr.bf16.mxu0 0
  %668 = vmatpush2.bf16.msra.mxu0 0
  %669 = vmatprep.subr.bf16.mxu0 0
  %670 = vmatpush2.bf16.msra.mxu0 0
  %671 = vmatprep.subr.bf16.mxu0 0
  %672 = vmatpush2.bf16.msra.mxu0 0
  %673 = vmatprep.subr.bf16.mxu0 0
  %674 = vmatpush2.bf16.msra.mxu0 0
  %675 = vmatprep.subr.bf16.mxu0 0
  %676 = vmatpush2.bf16.msra.mxu0 0
  %677 = vmatprep.mubr.bf16.mxu0 0
  %678 = vmatmul.mubr.bf16.gmra.mxu0 %v643
  %v679 = vpop.f32.mrf.mxu0
  %v680 = vadd.f32 0.0, %v679
  %v681 = vpop.f32.mrf.mxu0
  %v682 = vadd.f32 0.0, %v681
  %v683 = vpop.f32.mrf.mxu0
  %v684 = vadd.f32 0.0, %v683
  %v685 = vpop.f32.mrf.mxu0
  %v686 = vadd.f32 0.0, %v685
  %687 = vdwg.mxu0
  %v688 = vld [vmem:[%s185] sm:$0xff]
  %v689 = vld [vmem:[%s185 + $0x8] sm:$0xff]
  %v690 = vsel %vm204, %v680, %v682
  %v691 = vsel %vm205, %v684, %v686
  %v692 = vadd.f32 %v688, %v690
  %v693 = vadd.f32 %v689, %v691
  %v694 = vxor.u32 %v692, 2147483648
  %v695 = vxor.u32 %v693, 2147483648
  %v696 = vmul.f32 %v694, 1.442695
  %v697 = vpow.pop %v696
  %v698 = vmul.f32 %v695, 1.442695
  %v699 = vpow.pop %v698
  %v700 = vadd.f32 %v697, 1.0
  %v701 = vadd.f32 %v699, 1.0
  %v702 = vrcp.pop %v700
  %v703 = vmul.f32 1.0, %v702
  %v704 = vrcp.pop %v701
  %v705 = vmul.f32 1.0, %v704
  %v706 = vtanh.pop %v692
  %v707 = vtanh.pop %v693
  %v708 = vmul.f32 %v703, %v624
  %v709 = vmul.f32 %v705, %v625
  %712 = vrot.lane.b32.xlu0 %v706, 64
  %v713 = vpop.permute.xlu0 %712
  %714 = vrot.lane.b32.xlu0 %v707, 64
  %v715 = vpop.permute.xlu0 %714
  %v718 = vmul.f32 %v703, %v713
  %v719 = vmul.f32 %v705, %v715
  %722 = vrot.lane.b32.xlu0 %v718, 32
  %v723 = vpop.permute.xlu0 %722
  %724 = vrot.lane.b32.xlu0 %v719, 32
  %v725 = vpop.permute.xlu0 %724
  %v728 = vadd.f32 %v708, %v723
  %v729 = vadd.f32 %v709, %v725
  %v730 = vtanh.pop %v728
  %v731 = vtanh.pop %v729
  %734 = vrot.lane.b32.xlu0 %v730, 64
  %v735 = vpop.permute.xlu0 %734
  %736 = vrot.lane.b32.xlu0 %v731, 64
  %v737 = vpop.permute.xlu0 %736
  %v740 = vmul.f32 %v703, %v735
  %v741 = vmul.f32 %v705, %v737
  %v742 = vpack.c.bf16 %v741, %v740
  %744 = vrot.lane.b32.xlu0 %v742, 32
  %v745 = vpop.permute.xlu0 %744
  %v747 = vsel %vm88, %v745, 0
  %749 = vmatprep.subr.bf16.mxu0 0
  %750 = vmatpush1.bf16.msra.mxu0 0
  %751 = vmatprep.subr.bf16.mxu0 0
  %752 = vmatpush1.bf16.msra.mxu0 0
  %753 = vmatprep.subr.bf16.mxu0 0
  %754 = vmatpush1.bf16.msra.mxu0 0
  %755 = vmatprep.subr.bf16.mxu0 0
  %756 = vmatpush1.bf16.msra.mxu0 0
  %757 = vmatprep.subr.bf16.mxu0 0
  %758 = vmatpush1.bf16.msra.mxu0 0
  %759 = vmatprep.subr.bf16.mxu0 0
  %760 = vmatpush1.bf16.msra.mxu0 0
  %761 = vmatprep.subr.bf16.mxu0 %v221
  %762 = vmatpush1.bf16.msra.mxu0 %v220
  %763 = vmatprep.subr.bf16.mxu0 %v219
  %764 = vmatpush1.bf16.msra.mxu0 %v218
  %765 = vmatprep.subr.bf16.mxu0 0
  %766 = vmatpush2.bf16.msra.mxu0 0
  %767 = vmatprep.subr.bf16.mxu0 0
  %768 = vmatpush2.bf16.msra.mxu0 0
  %769 = vmatprep.subr.bf16.mxu0 0
  %770 = vmatpush2.bf16.msra.mxu0 0
  %771 = vmatprep.subr.bf16.mxu0 0
  %772 = vmatpush2.bf16.msra.mxu0 0
  %773 = vmatprep.subr.bf16.mxu0 0
  %774 = vmatpush2.bf16.msra.mxu0 0
  %775 = vmatprep.subr.bf16.mxu0 0
  %776 = vmatpush2.bf16.msra.mxu0 0
  %777 = vmatprep.subr.bf16.mxu0 0
  %778 = vmatpush2.bf16.msra.mxu0 0
  %779 = vmatprep.subr.bf16.mxu0 0
  %780 = vmatpush2.bf16.msra.mxu0 0
  %781 = vmatprep.mubr.bf16.mxu0 0
  %782 = vmatmul.mubr.bf16.gmra.mxu0 %v747
  %v783 = vpop.f32.mrf.mxu0
  %v784 = vadd.f32 0.0, %v783
  %v785 = vpop.f32.mrf.mxu0
  %v786 = vadd.f32 0.0, %v785
  %v787 = vpop.f32.mrf.mxu0
  %v788 = vadd.f32 0.0, %v787
  %v789 = vpop.f32.mrf.mxu0
  %v790 = vadd.f32 0.0, %v789
  %791 = vdwg.mxu0
  %v792 = vld [vmem:[%s188] sm:$0xff]
  %v793 = vld [vmem:[%s188 + $0x8] sm:$0xff]
  %v794 = vsel %vm204, %v784, %v786
  %v795 = vsel %vm205, %v788, %v790
  %v796 = vadd.f32 %v792, %v794
  %v797 = vadd.f32 %v793, %v795
  %v798 = vxor.u32 %v796, 2147483648
  %v799 = vxor.u32 %v797, 2147483648
  %v800 = vmul.f32 %v798, 1.442695
  %v801 = vpow.pop %v800
  %v802 = vmul.f32 %v799, 1.442695
  %v803 = vpow.pop %v802
  %v804 = vadd.f32 %v801, 1.0
  %v805 = vadd.f32 %v803, 1.0
  %v806 = vrcp.pop %v804
  %v807 = vmul.f32 1.0, %v806
  %v808 = vrcp.pop %v805
  %v809 = vmul.f32 1.0, %v808
  %v810 = vtanh.pop %v796
  %v811 = vtanh.pop %v797
  %v812 = vmul.f32 %v807, %v728
  %v813 = vmul.f32 %v809, %v729
  %816 = vrot.lane.b32.xlu0 %v810, 64
  %v817 = vpop.permute.xlu0 %816
  %818 = vrot.lane.b32.xlu0 %v811, 64
  %v819 = vpop.permute.xlu0 %818
  %v822 = vmul.f32 %v807, %v817
  %v823 = vmul.f32 %v809, %v819
  %826 = vrot.lane.b32.xlu0 %v822, 32
  %v827 = vpop.permute.xlu0 %826
  %828 = vrot.lane.b32.xlu0 %v823, 32
  %v829 = vpop.permute.xlu0 %828
  %v832 = vadd.f32 %v812, %v827
  %v833 = vadd.f32 %v813, %v829
  %v834 = vtanh.pop %v832
  %v835 = vtanh.pop %v833
  %838 = vrot.lane.b32.xlu0 %v834, 64
  %v839 = vpop.permute.xlu0 %838
  %840 = vrot.lane.b32.xlu0 %v835, 64
  %v841 = vpop.permute.xlu0 %840
  %v844 = vmul.f32 %v807, %v839
  %v845 = vmul.f32 %v809, %v841
  %v846 = vpack.c.bf16 %v845, %v844
  %848 = vrot.lane.b32.xlu0 %v846, 32
  %v849 = vpop.permute.xlu0 %848
  %v851 = vsel %vm88, %v849, 0
  %853 = vmatprep.subr.bf16.mxu0 0
  %854 = vmatpush1.bf16.msra.mxu0 0
  %855 = vmatprep.subr.bf16.mxu0 0
  %856 = vmatpush1.bf16.msra.mxu0 0
  %857 = vmatprep.subr.bf16.mxu0 0
  %858 = vmatpush1.bf16.msra.mxu0 0
  %859 = vmatprep.subr.bf16.mxu0 0
  %860 = vmatpush1.bf16.msra.mxu0 0
  %861 = vmatprep.subr.bf16.mxu0 0
  %862 = vmatpush1.bf16.msra.mxu0 0
  %863 = vmatprep.subr.bf16.mxu0 0
  %864 = vmatpush1.bf16.msra.mxu0 0
  %865 = vmatprep.subr.bf16.mxu0 %v221
  %866 = vmatpush1.bf16.msra.mxu0 %v220
  %867 = vmatprep.subr.bf16.mxu0 %v219
  %868 = vmatpush1.bf16.msra.mxu0 %v218
  %869 = vmatprep.subr.bf16.mxu0 0
  %870 = vmatpush2.bf16.msra.mxu0 0
  %871 = vmatprep.subr.bf16.mxu0 0
  %872 = vmatpush2.bf16.msra.mxu0 0
  %873 = vmatprep.subr.bf16.mxu0 0
  %874 = vmatpush2.bf16.msra.mxu0 0
  %875 = vmatprep.subr.bf16.mxu0 0
  %876 = vmatpush2.bf16.msra.mxu0 0
  %877 = vmatprep.subr.bf16.mxu0 0
  %878 = vmatpush2.bf16.msra.mxu0 0
  %879 = vmatprep.subr.bf16.mxu0 0
  %880 = vmatpush2.bf16.msra.mxu0 0
  %881 = vmatprep.subr.bf16.mxu0 0
  %882 = vmatpush2.bf16.msra.mxu0 0
  %883 = vmatprep.subr.bf16.mxu0 0
  %884 = vmatpush2.bf16.msra.mxu0 0
  %885 = vmatprep.mubr.bf16.mxu0 0
  %886 = vmatmul.mubr.bf16.gmra.mxu0 %v851
  %v887 = vpop.f32.mrf.mxu0
  %v888 = vadd.f32 0.0, %v887
  %v889 = vpop.f32.mrf.mxu0
  %v890 = vadd.f32 0.0, %v889
  %v891 = vpop.f32.mrf.mxu0
  %v892 = vadd.f32 0.0, %v891
  %v893 = vpop.f32.mrf.mxu0
  %v894 = vadd.f32 0.0, %v893
  %895 = vdwg.mxu0
  %v896 = vld [vmem:[%s191] sm:$0xff]
  %v897 = vld [vmem:[%s191 + $0x8] sm:$0xff]
  %v898 = vsel %vm204, %v888, %v890
  %v899 = vsel %vm205, %v892, %v894
  %v900 = vadd.f32 %v896, %v898
  %v901 = vadd.f32 %v897, %v899
  %v902 = vxor.u32 %v900, 2147483648
  %v903 = vxor.u32 %v901, 2147483648
  %v904 = vmul.f32 %v902, 1.442695
  %v905 = vpow.pop %v904
  %v906 = vmul.f32 %v903, 1.442695
  %v907 = vpow.pop %v906
  %v908 = vadd.f32 %v905, 1.0
  %v909 = vadd.f32 %v907, 1.0
  %v910 = vrcp.pop %v908
  %v911 = vmul.f32 1.0, %v910
  %v912 = vrcp.pop %v909
  %v913 = vmul.f32 1.0, %v912
  %v914 = vtanh.pop %v900
  %v915 = vtanh.pop %v901
  %v916 = vmul.f32 %v911, %v832
  %v917 = vmul.f32 %v913, %v833
  %920 = vrot.lane.b32.xlu0 %v914, 64
  %v921 = vpop.permute.xlu0 %920
  %922 = vrot.lane.b32.xlu0 %v915, 64
  %v923 = vpop.permute.xlu0 %922
  %v926 = vmul.f32 %v911, %v921
  %v927 = vmul.f32 %v913, %v923
  %930 = vrot.lane.b32.xlu0 %v926, 32
  %v931 = vpop.permute.xlu0 %930
  %932 = vrot.lane.b32.xlu0 %v927, 32
  %v933 = vpop.permute.xlu0 %932
  %v936 = vadd.f32 %v916, %v931
  %v937 = vadd.f32 %v917, %v933
  %v938 = vtanh.pop %v936
  %v939 = vtanh.pop %v937
  %942 = vrot.lane.b32.xlu0 %v938, 64
  %v943 = vpop.permute.xlu0 %942
  %944 = vrot.lane.b32.xlu0 %v939, 64
  %v945 = vpop.permute.xlu0 %944
  %v948 = vmul.f32 %v911, %v943
  %v949 = vmul.f32 %v913, %v945
  %v950 = vpack.c.bf16 %v949, %v948
  %952 = vrot.lane.b32.xlu0 %v950, 32
  %v953 = vpop.permute.xlu0 %952
  %v955 = vsel %vm88, %v953, 0
  %957 = vmatprep.subr.bf16.mxu0 0
  %958 = vmatpush1.bf16.msra.mxu0 0
  %959 = vmatprep.subr.bf16.mxu0 0
  %960 = vmatpush1.bf16.msra.mxu0 0
  %961 = vmatprep.subr.bf16.mxu0 0
  %962 = vmatpush1.bf16.msra.mxu0 0
  %963 = vmatprep.subr.bf16.mxu0 0
  %964 = vmatpush1.bf16.msra.mxu0 0
  %965 = vmatprep.subr.bf16.mxu0 0
  %966 = vmatpush1.bf16.msra.mxu0 0
  %967 = vmatprep.subr.bf16.mxu0 0
  %968 = vmatpush1.bf16.msra.mxu0 0
  %969 = vmatprep.subr.bf16.mxu0 %v221
  %970 = vmatpush1.bf16.msra.mxu0 %v220
  %971 = vmatprep.subr.bf16.mxu0 %v219
  %972 = vmatpush1.bf16.msra.mxu0 %v218
  %973 = vmatprep.subr.bf16.mxu0 0
  %974 = vmatpush2.bf16.msra.mxu0 0
  %975 = vmatprep.subr.bf16.mxu0 0
  %976 = vmatpush2.bf16.msra.mxu0 0
  %977 = vmatprep.subr.bf16.mxu0 0
  %978 = vmatpush2.bf16.msra.mxu0 0
  %979 = vmatprep.subr.bf16.mxu0 0
  %980 = vmatpush2.bf16.msra.mxu0 0
  %981 = vmatprep.subr.bf16.mxu0 0
  %982 = vmatpush2.bf16.msra.mxu0 0
  %983 = vmatprep.subr.bf16.mxu0 0
  %984 = vmatpush2.bf16.msra.mxu0 0
  %985 = vmatprep.subr.bf16.mxu0 0
  %986 = vmatpush2.bf16.msra.mxu0 0
  %987 = vmatprep.subr.bf16.mxu0 0
  %988 = vmatpush2.bf16.msra.mxu0 0
  %989 = vmatprep.mubr.bf16.mxu0 0
  %990 = vmatmul.mubr.bf16.gmra.mxu0 %v955
  %v991 = vpop.f32.mrf.mxu0
  %v992 = vadd.f32 0.0, %v991
  %v993 = vpop.f32.mrf.mxu0
  %v994 = vadd.f32 0.0, %v993
  %v995 = vpop.f32.mrf.mxu0
  %v996 = vadd.f32 0.0, %v995
  %v997 = vpop.f32.mrf.mxu0
  %v998 = vadd.f32 0.0, %v997
  %999 = vdwg.mxu0
  %v1000 = vld [vmem:[%s194] sm:$0xff]
  %v1001 = vld [vmem:[%s194 + $0x8] sm:$0xff]
  %v1002 = vsel %vm204, %v992, %v994
  %v1003 = vsel %vm205, %v996, %v998
  %v1004 = vadd.f32 %v1000, %v1002
  %v1005 = vadd.f32 %v1001, %v1003
  %v1006 = vxor.u32 %v1004, 2147483648
  %v1007 = vxor.u32 %v1005, 2147483648
  %v1008 = vmul.f32 %v1006, 1.442695
  %v1009 = vpow.pop %v1008
  %v1010 = vmul.f32 %v1007, 1.442695
  %v1011 = vpow.pop %v1010
  %v1012 = vadd.f32 %v1009, 1.0
  %v1013 = vadd.f32 %v1011, 1.0
  %v1014 = vrcp.pop %v1012
  %v1015 = vmul.f32 1.0, %v1014
  %v1016 = vrcp.pop %v1013
  %v1017 = vmul.f32 1.0, %v1016
  %v1018 = vtanh.pop %v1004
  %v1019 = vtanh.pop %v1005
  %v1020 = vmul.f32 %v1015, %v936
  %v1021 = vmul.f32 %v1017, %v937
  %1024 = vrot.lane.b32.xlu0 %v1018, 64
  %v1025 = vpop.permute.xlu0 %1024
  %1026 = vrot.lane.b32.xlu0 %v1019, 64
  %v1027 = vpop.permute.xlu0 %1026
  %v1030 = vmul.f32 %v1015, %v1025
  %v1031 = vmul.f32 %v1017, %v1027
  %1034 = vrot.lane.b32.xlu0 %v1030, 32
  %v1035 = vpop.permute.xlu0 %1034
  %1036 = vrot.lane.b32.xlu0 %v1031, 32
  %v1037 = vpop.permute.xlu0 %1036
  %v1040 = vadd.f32 %v1020, %v1035
  %v1041 = vadd.f32 %v1021, %v1037
  %v1042 = vtanh.pop %v1040
  %v1043 = vtanh.pop %v1041
  %1046 = vrot.lane.b32.xlu0 %v1042, 64
  %v1047 = vpop.permute.xlu0 %1046
  %1048 = vrot.lane.b32.xlu0 %v1043, 64
  %v1049 = vpop.permute.xlu0 %1048
  %v1052 = vmul.f32 %v1015, %v1047
  %v1053 = vmul.f32 %v1017, %v1049
  %1055 = vrot.lane.b32.xlu0 %v1052, 32
  %v1056 = vpop.permute.xlu0 %1055
  %1059 = vrot.lane.b32.xlu0 %v1053, 64
  %v1060 = vpop.permute.xlu0 %1059
  %v1062 = vsel %vm88, %v1056, %v1060
  %v1063 = vld [vmem:[%s4] sm:$0xff]
  %v1064 = vld [vmem:[%s4 + $0x8] sm:$0xff]
  %v1065 = vld [vmem:[%s4 + $0x10] sm:$0xff]
  %v1066 = vld [vmem:[%s4 + $0x18] sm:$0xff]
  %v1067 = vld [vmem:[%s4 + $0x20] sm:$0xff]
  %v1068 = vld [vmem:[%s4 + $0x28] sm:$0xff]
  %v1069 = vld [vmem:[%s4 + $0x30] sm:$0xff]
  %v1070 = vld [vmem:[%s4 + $0x38] sm:$0xff]
  %v1071 = vld [vmem:[%s5] sm:$0x1]
  %v1073 = vlaneseq
  %v1074 = vshrl.u32 %v1073, 7
  %v1075 = vsub.s32 0, %v1074
  %v1076 = vrot.slane %v1071, %v1075
  %vm1078 = vcmask 523264
  %v1080 = vsel %vm1078, %v1062, 0
  %1082 = vmatprep.subr.mxu0 0.0
  %1083 = vmatpush1.msra.mxu0 0.0
  %1084 = vmatprep.subr.mxu0 0.0
  %1085 = vmatpush1.msra.mxu0 0.0
  %1086 = vmatprep.subr.mxu0 0.0
  %1087 = vmatpush1.msra.mxu0 0.0
  %1088 = vmatprep.subr.mxu0 0.0
  %1089 = vmatpush1.msra.mxu0 0.0
  %1090 = vmatprep.subr.mxu0 0.0
  %1091 = vmatpush1.msra.mxu0 0.0
  %1092 = vmatprep.subr.mxu0 0.0
  %1093 = vmatpush1.msra.mxu0 0.0
  %1094 = vmatprep.subr.mxu0 0.0
  %1095 = vmatpush1.msra.mxu0 0.0
  %1096 = vmatprep.subr.mxu0 0.0
  %1097 = vmatpush1.msra.mxu0 0.0
  %1098 = vmatprep.subr.mxu0 0.0
  %1099 = vmatpush1.msra.mxu0 %v1070
  %1100 = vmatprep.subr.mxu0 0.0
  %1101 = vmatpush1.msra.mxu0 %v1069
  %1102 = vmatprep.subr.mxu0 0.0
  %1103 = vmatpush1.msra.mxu0 %v1068
  %1104 = vmatprep.subr.mxu0 0.0
  %1105 = vmatpush1.msra.mxu0 %v1067
  %1106 = vmatprep.subr.mxu0 0.0
  %1107 = vmatpush1.msra.mxu0 %v1066
  %1108 = vmatprep.subr.mxu0 0.0
  %1109 = vmatpush1.msra.mxu0 %v1065
  %1110 = vmatprep.subr.mxu0 0.0
  %1111 = vmatpush1.msra.mxu0 %v1064
  %1112 = vmatprep.subr.mxu0 0.0
  %1113 = vmatpush1.msra.mxu0 %v1063
  %1114 = vmatprep.subr.mxu0 0.0
  %1115 = vmatpush2.msra.mxu0 0.0
  %1116 = vmatprep.subr.mxu0 0.0
  %1117 = vmatpush2.msra.mxu0 0.0
  %1118 = vmatprep.subr.mxu0 0.0
  %1119 = vmatpush2.msra.mxu0 0.0
  %1120 = vmatprep.subr.mxu0 0.0
  %1121 = vmatpush2.msra.mxu0 0.0
  %1122 = vmatprep.subr.mxu0 0.0
  %1123 = vmatpush2.msra.mxu0 0.0
  %1124 = vmatprep.subr.mxu0 0.0
  %1125 = vmatpush2.msra.mxu0 0.0
  %1126 = vmatprep.subr.mxu0 0.0
  %1127 = vmatpush2.msra.mxu0 0.0
  %1128 = vmatprep.subr.mxu0 0.0
  %1129 = vmatpush2.msra.mxu0 0.0
  %1130 = vmatprep.subr.mxu0 0.0
  %1131 = vmatpush2.msra.mxu0 0.0
  %1132 = vmatprep.subr.mxu0 0.0
  %1133 = vmatpush2.msra.mxu0 0.0
  %1134 = vmatprep.subr.mxu0 0.0
  %1135 = vmatpush2.msra.mxu0 0.0
  %1136 = vmatprep.subr.mxu0 0.0
  %1137 = vmatpush2.msra.mxu0 0.0
  %1138 = vmatprep.subr.mxu0 0.0
  %1139 = vmatpush2.msra.mxu0 0.0
  %1140 = vmatprep.subr.mxu0 0.0
  %1141 = vmatpush2.msra.mxu0 0.0
  %1142 = vmatprep.subr.mxu0 0.0
  %1143 = vmatpush2.msra.mxu0 0.0
  %1144 = vmatprep.subr.mxu0 0.0
  %1145 = vmatpush2.msra.mxu0 0.0
  %1146 = vmatprep.mubr.f32.mxu0 0.0
  %1147 = vmatmul.mubr.f32.gmra.mxu0 %v1080
  %v1148 = vpop.f32.mrf.mxu0
  %v1149 = vadd.f32 %v1076, %v1148
  %v1150 = vpop.f32.mrf.mxu0
  %1151 = vdwg.mxu0
  %1152 = vst [vmem:[%s6] sm:$0xff] %v1149
  // Predicated region
  $region26: #{sentiment_classifier_forward.1} parent=0 // pred_check
    _
  $region27: #{sentiment_classifier_forward.1} parent=0 // pred_check_branch
    %1154 = sbr.rel (0) target = $region29
  $region28: #{sentiment_classifier_forward.1} parent=0 // pred_region
    _
  $region29: #{sentiment_classifier_forward.1} parent=0 // pred_fallthru
    _
  // Predicated region
  $region30: #{sentiment_classifier_forward.1} parent=0 // pred_check
    _
  $region31: #{sentiment_classifier_forward.1} parent=0 // pred_check_branch
    %1156 = sbr.rel (0) target = $region33
  $region32: #{sentiment_classifier_forward.1} parent=0 // pred_region
    _
  $region33: #{sentiment_classifier_forward.1} parent=0 // pred_fallthru
    _

</llo_original>
